<compile_context>
chip_gen: v7x
topology: tpu7x:2x2x1
jax: 0.10.0
libtpu: 0.0.40
codegen_flags: <defaults>
</compile_context>

<pallas_src>
import math
import functools

import jax
import jax.numpy as jnp
from jax.experimental import pallas as pl
from jax.experimental.pallas import tpu as pltpu


def mha_kernel(x_ref, mask_ref, wqkv_ref, bqkv_ref, wo_ref, bo_ref,
               out_ref, kv_ref, ctx_ref,
               *, num_heads: int, head_dim: int, q_tile: int, bf16_exp: bool):
    H = num_heads * head_dim
    qi = pl.program_id(1)

    # K|V projection for the full sequence — once per batch element, carried
    # across the (arbitrary) query-tile axis in VMEM scratch.
    @pl.when(qi == 0)
    def _():
        kv = jnp.dot(x_ref[0], wqkv_ref[:, H:3 * H],
                     preferred_element_type=jnp.float32) + bqkv_ref[:, H:3 * H]
        kv_ref[...] = kv.astype(jnp.bfloat16)            # (S, 2H) = [K | V]

    scale = 1.0 / math.sqrt(head_dim)

    # Query rows of this tile, sliced from the resident full-S x block
    # (no separate xq DMA stream).
    row0 = pl.multiple_of(qi * q_tile, q_tile)
    xq = x_ref[0, pl.ds(row0, q_tile), :]                # (TQ, H) bf16

    # Q projection; fold the softmax scale into Q once (O(TQ*H), not O(TQ*S*nh)).
    q = jnp.dot(xq, wqkv_ref[:, 0:H],
                preferred_element_type=jnp.float32) + bqkv_ref[:, 0:H]
    q = (q * scale).astype(jnp.bfloat16)                 # (TQ, H)

    mask = mask_ref[0, 0]                                # (TQ, S) bf16 additive

    for h in range(num_heads):                           # static unroll
        lo = h * head_dim
        hi = lo + head_dim
        qh = q[:, lo:hi]                                 # (TQ, d) bf16
        kh = kv_ref[:, lo:hi]                            # (S,  d) bf16
        vh = kv_ref[:, H + lo:H + hi]                    # (S,  d) bf16

        # Scores without materializing K^T: contract the head dim of both.
        scores = jax.lax.dot_general(
            qh, kh,
            dimension_numbers=(((1,), (1,)), ((), ())),
            preferred_element_type=jnp.float32)          # (TQ, S) f32
        scores = scores + mask                           # bf16 mask -> f32 add

        # Numerically stable softmax; row-sum + reciprocal stay in f32.
        m = jnp.max(scores, axis=-1, keepdims=True)
        if bf16_exp:                                     # bf16 EUP path (v6e/v7x)
            e = jnp.exp((scores - m).astype(jnp.bfloat16)).astype(jnp.float32)
        else:                                            # f32 EUP (v5e)
            e = jnp.exp(scores - m)
        denom = jnp.sum(e, axis=-1, keepdims=True)
        probs = (e * pl.reciprocal(denom, approx=True)).astype(jnp.bfloat16)

        # Per-head context into the (TQ, H) scratch — no lane concat, and the
        # output projection below runs at full MXU K depth.
        ctx_ref[:, lo:hi] = jnp.dot(
            probs, vh, preferred_element_type=jnp.float32).astype(jnp.bfloat16)

    # Single wide-K output projection: (TQ, H) @ (H, H).
    out = jnp.dot(ctx_ref[...], wo_ref[...],
                  preferred_element_type=jnp.float32) + bo_ref[...]
    out_ref[0] = out.astype(out_ref.dtype)


def _chip_info():
    """Chip-aware knobs: (is_v7x, use_bf16_exp, physical_vmem_bytes)."""
    try:
        kind = jax.devices()[0].device_kind.lower()
    except Exception:
        kind = ""
    is_v7 = "v7" in kind
    bf16_exp = ("v6" in kind) or is_v7          # v5e has no bf16 EUP/VPU path
    try:
        vmem_cap = pltpu.get_tpu_info().vmem_capacity_bytes
    except Exception:
        vmem_cap = (64 if is_v7 else 128) * 1024 * 1024
    return is_v7, bf16_exp, vmem_cap


def multi_head_attention(hidden_states, attention_mask, params,
                         num_heads: int, *, q_tile: int | None = None):
    B, S, H = hidden_states.shape
    assert H % num_heads == 0
    head_dim = H // num_heads

    is_v7, bf16_exp, vmem_cap = _chip_info()

    if q_tile is None:
        # On v7x (64 MiB VMEM) keep the per-step O(TQ*S) working set smaller.
        max_tile = 256 if (is_v7 and (S >= 2048 or H >= 1024)) else 512
        q_tile = S
        for cand in (512, 256, 128):
            if cand <= max_tile and S > cand and S % cand == 0:
                q_tile = cand
                break
    assert S % q_tile == 0, "sequence length must be divisible by the Q tile"
    num_q_tiles = S // q_tile
    # NOTE: realistic configs need H and S to be multiples of 128 and TQ a
    # multiple of 16 (bf16 sublane tiling); the tiny self-test shapes pass
    # because every block equals the full array extent.

    # Pack the three projection weights/biases once on the host: one operand,
    # one weight DMA stream, one wide-N MXU pass for K|V.
    wqkv = jnp.concatenate([params["wq"], params["wk"], params["wv"]], axis=1)
    bqkv = jnp.concatenate([params["bq"], params["bk"], params["bv"]], axis=1)

    # bf16 MXU inputs / mask stream; f32 accumulation & biases inside.
    x_bf16 = hidden_states.astype(jnp.bfloat16)
    wqkv = wqkv.astype(jnp.bfloat16)
    wo = params["wo"].astype(jnp.bfloat16)
    bqkv = bqkv.astype(jnp.float32)
    bo = params["bo"].astype(jnp.float32)
    mask = attention_mask.astype(jnp.bfloat16)     # halves the O(S^2) stream

    kernel = functools.partial(mha_kernel, num_heads=num_heads,
                               head_dim=head_dim, q_tile=q_tile,
                               bf16_exp=bf16_exp)

    # Constant-index operands: single-buffered (double-buffering buys nothing).
    def const_spec(shape):
        return pl.BlockSpec(shape, lambda b, qi: (0,) * len(shape),
                            pipeline_mode=pl.Buffered(1))

    # Advisory cost model: QKV proj + scores + ctx + output proj.
    flops = 2 * B * (S * H * 3 * H + 2 * S * S * H + S * H * H)
    cost = pl.CostEstimate(
        flops=flops,
        transcendentals=B * num_heads * S * S,
        bytes_accessed=(B * S * H * 2                       # x (bf16)
                        + B * S * S * 2                     # mask (bf16)
                        + (H * 3 * H + H * H) * 2           # weights (bf16)
                        + (3 * H + H) * 4                   # biases (f32)
                        + B * S * H * hidden_states.dtype.itemsize))

    return pl.pallas_call(
        kernel,
        out_shape=jax.ShapeDtypeStruct((B, S, H), hidden_states.dtype),
        grid=(B, num_q_tiles),
        in_specs=[
            pl.BlockSpec((1, S, H), lambda b, qi: (b, 0, 0)),              # x (full S)
            pl.BlockSpec((1, 1, q_tile, S), lambda b, qi: (b, 0, qi, 0)),  # mask tile
            const_spec((H, 3 * H)),                                        # packed Wqkv
            const_spec((1, 3 * H)),                                        # packed bqkv
            const_spec((H, H)),                                            # Wo
            const_spec((1, H)),                                            # bo
        ],
        out_specs=pl.BlockSpec((1, q_tile, H), lambda b, qi: (b, qi, 0)),
        scratch_shapes=[
            pltpu.VMEM((S, 2 * H), jnp.bfloat16),    # K|V, carried across qi
            pltpu.VMEM((q_tile, H), jnp.bfloat16),   # per-tile context
        ],
        compiler_params=pltpu.CompilerParams(
            # b parallel (v7x megacore shards by batch); qi arbitrary so the
            # KV scratch legally carries across query tiles.
            dimension_semantics=("parallel", "arbitrary"),
            # ~85% of physical VMEM: headroom for compiler-internal scratch.
            vmem_limit_bytes=int(vmem_cap * 0.85),
        ),
        cost_estimate=cost,
    )(x_bf16, mask, wqkv, bqkv, wo, bo)


def reference_mha(x, mask, params, num_heads):
    """Pure-JAX f32 reference mirroring the PyTorch forward (dropout=identity)."""
    B, S, H = x.shape
    d = H // num_heads

    def proj(w, b):
        return x @ w + b[0]

    def to_heads(t):  # (B, S, H) -> (B, nh, S, d)
        return t.reshape(B, S, num_heads, d).transpose(0, 2, 1, 3)

    q = to_heads(proj(params["wq"], params["bq"]))
    k = to_heads(proj(params["wk"], params["bk"]))
    v = to_heads(proj(params["wv"], params["bv"]))

    scores = jnp.einsum("bhqd,bhkd->bhqk", q, k) / math.sqrt(d)
    scores = scores + mask                      # mask broadcasts over heads
    probs = jax.nn.softmax(scores, axis=-1)
    ctx = jnp.einsum("bhqk,bhkd->bhqd", probs, v)
    ctx = ctx.transpose(0, 2, 1, 3).reshape(B, S, H)
    return ctx @ params["wo"] + params["bo"][0]


if __name__ == "__main__":
    # Small config consistent with the module: hidden_size=32, num_heads=4.
    B, S, H = 2, 8, 32
    num_heads = 4

    key = jax.random.PRNGKey(0)
    keys = jax.random.split(key, 11)

    def linear_params(kw, kb):
        # PyTorch nn.Linear weight is [out, in]; we store the transpose [in, out]
        # so the kernel computes y = x @ W + b.
        w = jax.random.normal(kw, (H, H), jnp.float32) * 0.05
        b = jax.random.normal(kb, (1, H), jnp.float32) * 0.01
        return w, b

    wq, bq = linear_params(keys[0], keys[1])
    wk, bk = linear_params(keys[2], keys[3])
    wv, bv = linear_params(keys[4], keys[5])
    wo, bo = linear_params(keys[6], keys[7])
    params = dict(wq=wq, bq=bq, wk=wk, bk=bk, wv=wv, bv=bv, wo=wo, bo=bo)

    hidden_states = jax.random.normal(keys[8], (B, S, H), jnp.float32)
    # Additive attention mask (0 for keep, -1e9 for masked), [B, 1, S, S].
    mask_bits = jax.random.bernoulli(keys[9], 0.9, (B, 1, S, S))
    attention_mask = jnp.where(mask_bits, 0.0, -1e9).astype(jnp.float32)

    out = multi_head_attention(hidden_states, attention_mask, params, num_heads)
    out = jax.block_until_ready(out)

    ref = reference_mha(hidden_states, attention_mask, params, num_heads)
    assert out.shape == (B, S, H)
    # bf16 MXU inputs + bf16 mask/exp + approx reciprocal => looser tolerance.
    assert jnp.allclose(out, ref, atol=2e-2, rtol=2e-2), "mismatch vs reference"

    print("KERNEL_OK")
</pallas_src>

<mosaic_0001>
module attributes {stable_mosaic.version = 11 : i64} {
  func.func @mha_kernel(%arg0: i32, %arg1: i32, %arg2: memref<1x8x32xbf16, #tpu.memory_space<vmem>>, %arg3: memref<1x1x8x8xbf16, #tpu.memory_space<vmem>>, %arg4: memref<32x96xbf16, #tpu.memory_space<vmem>>, %arg5: memref<1x96xf32, #tpu.memory_space<vmem>>, %arg6: memref<32x32xbf16, #tpu.memory_space<vmem>>, %arg7: memref<1x32xf32, #tpu.memory_space<vmem>>, %arg8: memref<1x8x32xf32, #tpu.memory_space<vmem>>, %arg9: memref<8x64xbf16, #tpu.memory_space<vmem>>, %arg10: memref<8x32xbf16, #tpu.memory_space<vmem>>) attributes {dimension_semantics = [#tpu.dimension_semantics<parallel>, #tpu.dimension_semantics<arbitrary>], iteration_bounds = array<i64: 2, 1>, scalar_prefetch = 0 : i64, scratch_operands = 2 : i64, tpu.core_type = #tpu.core_type<tc>, window_params = [{transform_indices = @transform_0, window_bounds = array<i64: 1, 8, 32>}, {transform_indices = @transform_1, window_bounds = array<i64: 1, 1, 8, 8>}, {pipeline_mode = #tpu.pipeline_mode<synchronous>, transform_indices = @transform_2, window_bounds = array<i64: 32, 96>}, {pipeline_mode = #tpu.pipeline_mode<synchronous>, transform_indices = @transform_3, window_bounds = array<i64: 1, 96>}, {pipeline_mode = #tpu.pipeline_mode<synchronous>, transform_indices = @transform_4, window_bounds = array<i64: 32, 32>}, {pipeline_mode = #tpu.pipeline_mode<synchronous>, transform_indices = @transform_5, window_bounds = array<i64: 1, 32>}, {transform_indices = @transform_6, window_bounds = array<i64: 1, 8, 32>}]} {
    %c0_i32 = arith.constant 0 : i32
    %0 = arith.cmpi eq, %arg1, %c0_i32 : i32
    %1 = arith.extui %0 : i1 to i32
    %c0_i32_0 = arith.constant 0 : i32
    %2 = arith.cmpi ne, %1, %c0_i32_0 : i32
    scf.if %2 {
      %c0_54 = arith.constant 0 : index
      %c0_55 = arith.constant 0 : index
      %c0_56 = arith.constant 0 : index
      %107 = vector.load %arg2[%c0_54, %c0_55, %c0_56] : memref<1x8x32xbf16, #tpu.memory_space<vmem>>, vector<1x8x32xbf16>
      %108 = vector.shape_cast %107 : vector<1x8x32xbf16> to vector<8x32xbf16>
      %c0_57 = arith.constant 0 : index
      %c32_58 = arith.constant 32 : index
      %109 = vector.load %arg4[%c0_57, %c32_58] : memref<32x96xbf16, #tpu.memory_space<vmem>>, vector<32x64xbf16>
      %cst_59 = arith.constant dense<0.000000e+00> : vector<8x64xf32>
      %110 = tpu.matmul %108, %109, %cst_59 {dimension_numbers = #tpu.dot_dimension_numbers<[1], [0], [0], [1], [0, 0, 1, 1], [], []>} : vector<8x32xbf16>, vector<32x64xbf16>, vector<8x64xf32> -> vector<8x64xf32>
      %c0_60 = arith.constant 0 : index
      %c32_61 = arith.constant 32 : index
      %111 = vector.load %arg5[%c0_60, %c32_61] : memref<1x96xf32, #tpu.memory_space<vmem>>, vector<1x64xf32>
      %112 = vector.broadcast %111 : vector<1x64xf32> to vector<8x64xf32>
      %113 = arith.addf %110, %112 : vector<8x64xf32>
      %114 = arith.truncf %113 : vector<8x64xf32> to vector<8x64xbf16>
      %c0_62 = arith.constant 0 : index
      %c0_63 = arith.constant 0 : index
      %115 = vector.load %arg9[%c0_62, %c0_63] : memref<8x64xbf16, #tpu.memory_space<vmem>>, vector<8x64xbf16>
      tpu.vector_store %arg9[%c0_62, %c0_63], %114 {strides = array<i32>} : memref<8x64xbf16, #tpu.memory_space<vmem>>, vector<8x64xbf16>,
    } else {
    }
    %c8_i32 = arith.constant 8 : i32
    %3 = arith.muli %arg1, %c8_i32 : i32
    %4 = tpu.assume_multiple %3, 8 : i32
    %c0 = arith.constant 0 : index
    %5 = arith.index_cast %4 : i32 to index
    %c0_1 = arith.constant 0 : index
    %6 = vector.load %arg2[%c0, %5, %c0_1] : memref<1x8x32xbf16, #tpu.memory_space<vmem>>, vector<1x8x32xbf16>
    %7 = vector.shape_cast %6 : vector<1x8x32xbf16> to vector<8x32xbf16>
    %c0_2 = arith.constant 0 : index
    %c0_3 = arith.constant 0 : index
    %8 = vector.load %arg4[%c0_2, %c0_3] : memref<32x96xbf16, #tpu.memory_space<vmem>>, vector<32x32xbf16>
    %cst = arith.constant dense<0.000000e+00> : vector<8x32xf32>
    %9 = tpu.matmul %7, %8, %cst {dimension_numbers = #tpu.dot_dimension_numbers<[1], [0], [0], [1], [0, 0, 1, 1], [], []>} : vector<8x32xbf16>, vector<32x32xbf16>, vector<8x32xf32> -> vector<8x32xf32>
    %c0_4 = arith.constant 0 : index
    %c0_5 = arith.constant 0 : index
    %10 = vector.load %arg5[%c0_4, %c0_5] : memref<1x96xf32, #tpu.memory_space<vmem>>, vector<1x32xf32>
    %11 = vector.broadcast %10 : vector<1x32xf32> to vector<8x32xf32>
    %12 = arith.addf %9, %11 : vector<8x32xf32>
    %cst_6 = arith.constant 0.353553385 : f32
    %13 = vector.broadcast %cst_6 : f32 to vector<8x32xf32>
    %14 = arith.mulf %12, %13 : vector<8x32xf32>
    %15 = arith.truncf %14 : vector<8x32xf32> to vector<8x32xbf16>
    %c0_7 = arith.constant 0 : index
    %c0_8 = arith.constant 0 : index
    %c0_9 = arith.constant 0 : index
    %c0_10 = arith.constant 0 : index
    %16 = vector.load %arg3[%c0_7, %c0_8, %c0_9, %c0_10] : memref<1x1x8x8xbf16, #tpu.memory_space<vmem>>, vector<1x1x8x8xbf16>
    %17 = vector.shape_cast %16 : vector<1x1x8x8xbf16> to vector<8x8xbf16>
    %18 = vector.extract_strided_slice %15 {offsets = [0, 0], sizes = [8, 8], strides = [1, 1]} : vector<8x32xbf16> to vector<8x8xbf16>
    %c0_11 = arith.constant 0 : index
    %c0_12 = arith.constant 0 : index
    %19 = vector.load %arg9[%c0_11, %c0_12] : memref<8x64xbf16, #tpu.memory_space<vmem>>, vector<8x8xbf16>
    %c0_13 = arith.constant 0 : index
    %c32 = arith.constant 32 : index
    %20 = vector.load %arg9[%c0_13, %c32] : memref<8x64xbf16, #tpu.memory_space<vmem>>, vector<8x8xbf16>
    %cst_14 = arith.constant dense<0.000000e+00> : vector<8x8xf32>
    %21 = tpu.matmul %18, %19, %cst_14 {dimension_numbers = #tpu.dot_dimension_numbers<[1], [1], [0], [0], [0, 0, 1, 0], [], []>} : vector<8x8xbf16>, vector<8x8xbf16>, vector<8x8xf32> -> vector<8x8xf32>
    %22 = arith.extf %17 : vector<8x8xbf16> to vector<8x8xf32>
    %23 = arith.addf %21, %22 : vector<8x8xf32>
    %cst_15 = arith.constant dense<0xFF800000> : vector<8xf32>
    %24 = vector.multi_reduction <maximumf>, %23, %cst_15 [1] : vector<8x8xf32> to vector<8xf32>
    %25 = vector.shape_cast %24 : vector<8xf32> to vector<8x1xf32>
    %26 = vector.broadcast %25 : vector<8x1xf32> to vector<8x8xf32>
    %27 = arith.subf %23, %26 : vector<8x8xf32>
    %28 = math.exp %27 : vector<8x8xf32>
    %cst_16 = arith.constant dense<0.000000e+00> : vector<8xf32>
    %29 = vector.multi_reduction <add>, %28, %cst_16 [1] : vector<8x8xf32> to vector<8xf32>
    %30 = vector.shape_cast %29 : vector<8xf32> to vector<8x1xf32>
    %31 = tpu.reciprocal %30 {approx = true} : vector<8x1xf32> -> vector<8x1xf32>
    %32 = vector.broadcast %31 : vector<8x1xf32> to vector<8x8xf32>
    %33 = arith.mulf %28, %32 : vector<8x8xf32>
    %34 = arith.truncf %33 : vector<8x8xf32> to vector<8x8xbf16>
    %cst_17 = arith.constant dense<0.000000e+00> : vector<8x8xf32>
    %35 = tpu.matmul %34, %20, %cst_17 {dimension_numbers = #tpu.dot_dimension_numbers<[1], [0], [0], [1], [0, 0, 1, 1], [], []>} : vector<8x8xbf16>, vector<8x8xbf16>, vector<8x8xf32> -> vector<8x8xf32>
    %36 = arith.truncf %35 : vector<8x8xf32> to vector<8x8xbf16>
    %c0_18 = arith.constant 0 : index
    %c0_19 = arith.constant 0 : index
    %37 = vector.load %arg10[%c0_18, %c0_19] : memref<8x32xbf16, #tpu.memory_space<vmem>>, vector<8x8xbf16>
    tpu.vector_store %arg10[%c0_18, %c0_19], %36 {strides = array<i32>} : memref<8x32xbf16, #tpu.memory_space<vmem>>, vector<8x8xbf16>,
    %38 = vector.extract_strided_slice %15 {offsets = [0, 8], sizes = [8, 8], strides = [1, 1]} : vector<8x32xbf16> to vector<8x8xbf16>
    %c0_20 = arith.constant 0 : index
    %c8 = arith.constant 8 : index
    %39 = vector.load %arg9[%c0_20, %c8] : memref<8x64xbf16, #tpu.memory_space<vmem>>, vector<8x8xbf16>
    %c0_21 = arith.constant 0 : index
    %c40 = arith.constant 40 : index
    %40 = vector.load %arg9[%c0_21, %c40] : memref<8x64xbf16, #tpu.memory_space<vmem>>, vector<8x8xbf16>
    %cst_22 = arith.constant dense<0.000000e+00> : vector<8x8xf32>
    %41 = tpu.matmul %38, %39, %cst_22 {dimension_numbers = #tpu.dot_dimension_numbers<[1], [1], [0], [0], [0, 0, 1, 0], [], []>} : vector<8x8xbf16>, vector<8x8xbf16>, vector<8x8xf32> -> vector<8x8xf32>
    %42 = arith.extf %17 : vector<8x8xbf16> to vector<8x8xf32>
    %43 = arith.addf %41, %42 : vector<8x8xf32>
    %cst_23 = arith.constant dense<0xFF800000> : vector<8xf32>
    %44 = vector.multi_reduction <maximumf>, %43, %cst_23 [1] : vector<8x8xf32> to vector<8xf32>
    %45 = vector.shape_cast %44 : vector<8xf32> to vector<8x1xf32>
    %46 = vector.broadcast %45 : vector<8x1xf32> to vector<8x8xf32>
    %47 = arith.subf %43, %46 : vector<8x8xf32>
    %48 = math.exp %47 : vector<8x8xf32>
    %cst_24 = arith.constant dense<0.000000e+00> : vector<8xf32>
    %49 = vector.multi_reduction <add>, %48, %cst_24 [1] : vector<8x8xf32> to vector<8xf32>
    %50 = vector.shape_cast %49 : vector<8xf32> to vector<8x1xf32>
    %51 = tpu.reciprocal %50 {approx = true} : vector<8x1xf32> -> vector<8x1xf32>
    %52 = vector.broadcast %51 : vector<8x1xf32> to vector<8x8xf32>
    %53 = arith.mulf %48, %52 : vector<8x8xf32>
    %54 = arith.truncf %53 : vector<8x8xf32> to vector<8x8xbf16>
    %cst_25 = arith.constant dense<0.000000e+00> : vector<8x8xf32>
    %55 = tpu.matmul %54, %40, %cst_25 {dimension_numbers = #tpu.dot_dimension_numbers<[1], [0], [0], [1], [0, 0, 1, 1], [], []>} : vector<8x8xbf16>, vector<8x8xbf16>, vector<8x8xf32> -> vector<8x8xf32>
    %56 = arith.truncf %55 : vector<8x8xf32> to vector<8x8xbf16>
    %c0_26 = arith.constant 0 : index
    %c8_27 = arith.constant 8 : index
    %57 = vector.load %arg10[%c0_26, %c8_27] : memref<8x32xbf16, #tpu.memory_space<vmem>>, vector<8x8xbf16>
    tpu.vector_store %arg10[%c0_26, %c8_27], %56 {strides = array<i32>} : memref<8x32xbf16, #tpu.memory_space<vmem>>, vector<8x8xbf16>,
    %58 = vector.extract_strided_slice %15 {offsets = [0, 16], sizes = [8, 8], strides = [1, 1]} : vector<8x32xbf16> to vector<8x8xbf16>
    %c0_28 = arith.constant 0 : index
    %c16 = arith.constant 16 : index
    %59 = vector.load %arg9[%c0_28, %c16] : memref<8x64xbf16, #tpu.memory_space<vmem>>, vector<8x8xbf16>
    %c0_29 = arith.constant 0 : index
    %c48 = arith.constant 48 : index
    %60 = vector.load %arg9[%c0_29, %c48] : memref<8x64xbf16, #tpu.memory_space<vmem>>, vector<8x8xbf16>
    %cst_30 = arith.constant dense<0.000000e+00> : vector<8x8xf32>
    %61 = tpu.matmul %58, %59, %cst_30 {dimension_numbers = #tpu.dot_dimension_numbers<[1], [1], [0], [0], [0, 0, 1, 0], [], []>} : vector<8x8xbf16>, vector<8x8xbf16>, vector<8x8xf32> -> vector<8x8xf32>
    %62 = arith.extf %17 : vector<8x8xbf16> to vector<8x8xf32>
    %63 = arith.addf %61, %62 : vector<8x8xf32>
    %cst_31 = arith.constant dense<0xFF800000> : vector<8xf32>
    %64 = vector.multi_reduction <maximumf>, %63, %cst_31 [1] : vector<8x8xf32> to vector<8xf32>
    %65 = vector.shape_cast %64 : vector<8xf32> to vector<8x1xf32>
    %66 = vector.broadcast %65 : vector<8x1xf32> to vector<8x8xf32>
    %67 = arith.subf %63, %66 : vector<8x8xf32>
    %68 = math.exp %67 : vector<8x8xf32>
    %cst_32 = arith.constant dense<0.000000e+00> : vector<8xf32>
    %69 = vector.multi_reduction <add>, %68, %cst_32 [1] : vector<8x8xf32> to vector<8xf32>
    %70 = vector.shape_cast %69 : vector<8xf32> to vector<8x1xf32>
    %71 = tpu.reciprocal %70 {approx = true} : vector<8x1xf32> -> vector<8x1xf32>
    %72 = vector.broadcast %71 : vector<8x1xf32> to vector<8x8xf32>
    %73 = arith.mulf %68, %72 : vector<8x8xf32>
    %74 = arith.truncf %73 : vector<8x8xf32> to vector<8x8xbf16>
    %cst_33 = arith.constant dense<0.000000e+00> : vector<8x8xf32>
    %75 = tpu.matmul %74, %60, %cst_33 {dimension_numbers = #tpu.dot_dimension_numbers<[1], [0], [0], [1], [0, 0, 1, 1], [], []>} : vector<8x8xbf16>, vector<8x8xbf16>, vector<8x8xf32> -> vector<8x8xf32>
    %76 = arith.truncf %75 : vector<8x8xf32> to vector<8x8xbf16>
    %c0_34 = arith.constant 0 : index
    %c16_35 = arith.constant 16 : index
    %77 = vector.load %arg10[%c0_34, %c16_35] : memref<8x32xbf16, #tpu.memory_space<vmem>>, vector<8x8xbf16>
    tpu.vector_store %arg10[%c0_34, %c16_35], %76 {strides = array<i32>} : memref<8x32xbf16, #tpu.memory_space<vmem>>, vector<8x8xbf16>,
    %78 = vector.extract_strided_slice %15 {offsets = [0, 24], sizes = [8, 8], strides = [1, 1]} : vector<8x32xbf16> to vector<8x8xbf16>
    %c0_36 = arith.constant 0 : index
    %c24 = arith.constant 24 : index
    %79 = vector.load %arg9[%c0_36, %c24] : memref<8x64xbf16, #tpu.memory_space<vmem>>, vector<8x8xbf16>
    %c0_37 = arith.constant 0 : index
    %c56 = arith.constant 56 : index
    %80 = vector.load %arg9[%c0_37, %c56] : memref<8x64xbf16, #tpu.memory_space<vmem>>, vector<8x8xbf16>
    %cst_38 = arith.constant dense<0.000000e+00> : vector<8x8xf32>
    %81 = tpu.matmul %78, %79, %cst_38 {dimension_numbers = #tpu.dot_dimension_numbers<[1], [1], [0], [0], [0, 0, 1, 0], [], []>} : vector<8x8xbf16>, vector<8x8xbf16>, vector<8x8xf32> -> vector<8x8xf32>
    %82 = arith.extf %17 : vector<8x8xbf16> to vector<8x8xf32>
    %83 = arith.addf %81, %82 : vector<8x8xf32>
    %cst_39 = arith.constant dense<0xFF800000> : vector<8xf32>
    %84 = vector.multi_reduction <maximumf>, %83, %cst_39 [1] : vector<8x8xf32> to vector<8xf32>
    %85 = vector.shape_cast %84 : vector<8xf32> to vector<8x1xf32>
    %86 = vector.broadcast %85 : vector<8x1xf32> to vector<8x8xf32>
    %87 = arith.subf %83, %86 : vector<8x8xf32>
    %88 = math.exp %87 : vector<8x8xf32>
    %cst_40 = arith.constant dense<0.000000e+00> : vector<8xf32>
    %89 = vector.multi_reduction <add>, %88, %cst_40 [1] : vector<8x8xf32> to vector<8xf32>
    %90 = vector.shape_cast %89 : vector<8xf32> to vector<8x1xf32>
    %91 = tpu.reciprocal %90 {approx = true} : vector<8x1xf32> -> vector<8x1xf32>
    %92 = vector.broadcast %91 : vector<8x1xf32> to vector<8x8xf32>
    %93 = arith.mulf %88, %92 : vector<8x8xf32>
    %94 = arith.truncf %93 : vector<8x8xf32> to vector<8x8xbf16>
    %cst_41 = arith.constant dense<0.000000e+00> : vector<8x8xf32>
    %95 = tpu.matmul %94, %80, %cst_41 {dimension_numbers = #tpu.dot_dimension_numbers<[1], [0], [0], [1], [0, 0, 1, 1], [], []>} : vector<8x8xbf16>, vector<8x8xbf16>, vector<8x8xf32> -> vector<8x8xf32>
    %96 = arith.truncf %95 : vector<8x8xf32> to vector<8x8xbf16>
    %c0_42 = arith.constant 0 : index
    %c24_43 = arith.constant 24 : index
    %97 = vector.load %arg10[%c0_42, %c24_43] : memref<8x32xbf16, #tpu.memory_space<vmem>>, vector<8x8xbf16>
    tpu.vector_store %arg10[%c0_42, %c24_43], %96 {strides = array<i32>} : memref<8x32xbf16, #tpu.memory_space<vmem>>, vector<8x8xbf16>,
    %c0_44 = arith.constant 0 : index
    %c0_45 = arith.constant 0 : index
    %98 = vector.load %arg10[%c0_44, %c0_45] : memref<8x32xbf16, #tpu.memory_space<vmem>>, vector<8x32xbf16>
    %c0_46 = arith.constant 0 : index
    %c0_47 = arith.constant 0 : index
    %99 = vector.load %arg6[%c0_46, %c0_47] : memref<32x32xbf16, #tpu.memory_space<vmem>>, vector<32x32xbf16>
    %cst_48 = arith.constant dense<0.000000e+00> : vector<8x32xf32>
    %100 = tpu.matmul %98, %99, %cst_48 {dimension_numbers = #tpu.dot_dimension_numbers<[1], [0], [0], [1], [0, 0, 1, 1], [], []>} : vector<8x32xbf16>, vector<32x32xbf16>, vector<8x32xf32> -> vector<8x32xf32>
    %c0_49 = arith.constant 0 : index
    %c0_50 = arith.constant 0 : index
    %101 = vector.load %arg7[%c0_49, %c0_50] : memref<1x32xf32, #tpu.memory_space<vmem>>, vector<1x32xf32>
    %102 = vector.broadcast %101 : vector<1x32xf32> to vector<8x32xf32>
    %103 = arith.addf %100, %102 : vector<8x32xf32>
    %c0_51 = arith.constant 0 : index
    %c0_52 = arith.constant 0 : index
    %c0_53 = arith.constant 0 : index
    %104 = vector.load %arg8[%c0_51, %c0_52, %c0_53] : memref<1x8x32xf32, #tpu.memory_space<vmem>>, vector<1x8x32xf32>
    %105 = vector.shape_cast %104 : vector<1x8x32xf32> to vector<8x32xf32>
    %106 = vector.shape_cast %103 : vector<8x32xf32> to vector<1x8x32xf32>
    tpu.vector_store %arg8[%c0_51, %c0_52, %c0_53], %106 {strides = array<i32>} : memref<1x8x32xf32, #tpu.memory_space<vmem>>, vector<1x8x32xf32>,
    return
  }
  func.func @transform_0(%arg0: i32, %arg1: i32) -> (i32, i32, i32) {
    %c0_i32 = arith.constant 0 : i32
    %c0_i32_0 = arith.constant 0 : i32
    %c0_i32_1 = arith.constant 0 : i32
    return %arg0, %c0_i32, %c0_i32_0 : i32, i32, i32
  }
  func.func @transform_1(%arg0: i32, %arg1: i32) -> (i32, i32, i32, i32) {
    %c0_i32 = arith.constant 0 : i32
    %c0_i32_0 = arith.constant 0 : i32
    %c0_i32_1 = arith.constant 0 : i32
    return %arg0, %c0_i32, %arg1, %c0_i32_0 : i32, i32, i32, i32
  }
  func.func @transform_2(%arg0: i32, %arg1: i32) -> (i32, i32) {
    %c0_i32 = arith.constant 0 : i32
    %c0_i32_0 = arith.constant 0 : i32
    %c0_i32_1 = arith.constant 0 : i32
    return %c0_i32, %c0_i32_0 : i32, i32
  }
  func.func @transform_3(%arg0: i32, %arg1: i32) -> (i32, i32) {
    %c0_i32 = arith.constant 0 : i32
    %c0_i32_0 = arith.constant 0 : i32
    %c0_i32_1 = arith.constant 0 : i32
    return %c0_i32, %c0_i32_0 : i32, i32
  }
  func.func @transform_4(%arg0: i32, %arg1: i32) -> (i32, i32) {
    %c0_i32 = arith.constant 0 : i32
    %c0_i32_0 = arith.constant 0 : i32
    %c0_i32_1 = arith.constant 0 : i32
    return %c0_i32, %c0_i32_0 : i32, i32
  }
  func.func @transform_5(%arg0: i32, %arg1: i32) -> (i32, i32) {
    %c0_i32 = arith.constant 0 : i32
    %c0_i32_0 = arith.constant 0 : i32
    %c0_i32_1 = arith.constant 0 : i32
    return %c0_i32, %c0_i32_0 : i32, i32
  }
  func.func @transform_6(%arg0: i32, %arg1: i32) -> (i32, i32, i32) {
    %c0_i32 = arith.constant 0 : i32
    %c0_i32_0 = arith.constant 0 : i32
    return %arg0, %arg1, %c0_i32 : i32, i32, i32
  }
}

</mosaic_0001>

<llo_original>
// kernel: tpu_custom_call.1
$region0: #{tpu_custom_call.1}
  #allocation0 [shape = 'u32[]', space=smem, size = 0x4, offset = 0x4, fixed_abs, tag = 'smem constant byte address 0x4 - core index']
  #allocation1 [shape = 'u32[144,128]{1,0:T(1,128)}', space=vmem, size = 0x12000, scoped, tag = 'internal scratch']
  #allocation2 [shape = 'bf16[8,64]{1,0:T(8,128)(2,1)}', space=vmem, size = 0x800, scoped, tag = 'scratch operand']
  #allocation3 [shape = 'bf16[8,32]{1,0:T(8,128)(2,1)}', space=vmem, size = 0x800, scoped, tag = 'scratch operand']
  %s0 = inlined_call_operand.hbm [shape: bf16[2,8,32], index: 0, kind: input, shape index: {}]
  %s1 = inlined_call_operand.hbm [shape: bf16[2,1,8,8], index: 1, kind: input, shape index: {}]
  %s2 = inlined_call_operand.hbm [shape: bf16[32,96], index: 2, kind: input, shape index: {}]
  %s3 = inlined_call_operand.hbm [shape: f32[1,96], index: 3, kind: input, shape index: {}]
  %s4 = inlined_call_operand.hbm [shape: bf16[32,32], index: 4, kind: input, shape index: {}]
  %s5 = inlined_call_operand.hbm [shape: f32[1,32], index: 5, kind: input, shape index: {}]
  %s6 = inlined_call_operand.hbm [shape: f32[2,8,32], index: 6, kind: output, shape index: {}]
  %s7 = sld [smem:[#allocation0]]
  $region85: #{tpu_custom_call.1} parent=0
    _
  %s9 = ssub.s32 1, %s7
  %s10 = scalar_select 0, %s9, %s7
  $region1: #{tpu_custom_call.1} parent=0
    #allocation4 [shape = 'u8[4096]{0}', space=vmem, size = 0x1000, scoped, tag = 'input window, operand 0']
    #allocation5 [shape = 's32[2]{0}', space=sflag, size = 0x8, scoped, tag = 'scoped memory for tpu_custom_call.1']
    #allocation6 [shape = 's32[2]{0}', space=sflag, size = 0x8, scoped, tag = 'scoped memory for tpu_custom_call.1']
    #allocation7 [shape = 'u8[4096]{0}', space=vmem, size = 0x1000, scoped, tag = 'input window, operand 1']
    #allocation8 [shape = 's32[2]{0}', space=sflag, size = 0x8, scoped, tag = 'scoped memory for tpu_custom_call.1']
    #allocation9 [shape = 'u8[8192]{0}', space=vmem, size = 0x2000, scoped, tag = 'input window, operand 2, single buffered']
    #allocation10 [shape = 'u8[512]{0}', space=vmem, size = 0x400, scoped, tag = 'input window, operand 3, single buffered']
    #allocation11 [shape = 's32[1]{0}', space=sflag, size = 0x4, scoped, tag = 'scoped memory for tpu_custom_call.1']
    #allocation12 [shape = 'u8[8192]{0}', space=vmem, size = 0x2000, scoped, tag = 'input window, operand 4, single buffered']
    #allocation13 [shape = 'u8[512]{0}', space=vmem, size = 0x400, scoped, tag = 'input window, operand 5, single buffered']
    #allocation14 [shape = 's32[1]{0}', space=sflag, size = 0x4, scoped, tag = 'scoped memory for tpu_custom_call.1']
    #allocation15 [shape = 'u8[8192]{0}', space=vmem, size = 0x2000, scoped, tag = 'output window, operand 0']
    %11 = vsyncpa [#allocation5], 0
    %s12 = scalar_lea.sflag [#allocation5], 1
    %13 = vsyncpa %s12, 0
    %14 = vsyncpa [#allocation8], 0
    %s15 = scalar_lea.sflag [#allocation8], 1
    %16 = vsyncpa %s15, 0
    %17 = vsyncpa [#allocation11], 0
    %18 = vsyncpa [#allocation14], 0
    %19 = vsyncpa [#allocation6], 0
    %s20 = scalar_lea.sflag [#allocation6], 1
    %21 = vsyncpa %s20, 0
    loop: start=0, step=1, limit=4
    $region2: #{tpu_custom_call.1} parent=1 // loop_pre_header
      _
    $region3: #{tpu_custom_call.1} parent=1 // loop_header
      %s23 = sphi 0, %s27
      %p24 = scmp.ge.s32.totalorder %s23, 4
      %s30 = sphi 0, %s42
      %s31 = sphi 0, %s38
      %s32 = sphi 0, %s30
      %s33 = sphi 0, %s31
      %s34 = sphi 0, %s32
      %s35 = sphi 0, %s33
      %s45 = sphi 0, %s47
      %s48 = sphi 0, %s45
      %s49 = sphi 0, %s48
      %s65 = sphi 0, %s49
      %s73 = sphi 0, %s75
      %s76 = sphi 0, %s73
      %s77 = sphi 0, %s76
      %s93 = sphi 0, %s77
      %s97 = sphi 0, %s97
      %s99 = sphi 0, %s97
      %s100 = sphi 0, %s99
      %s114 = sphi 0, %s100
      %s118 = sphi 0, %s118
      %s120 = sphi 0, %s118
      %s121 = sphi 0, %s120
      %s135 = sphi 0, %s121
      %s139 = sphi 0, %s139
      %s141 = sphi 0, %s139
      %s142 = sphi 0, %s141
      %s156 = sphi 0, %s142
      %s160 = sphi 0, %s160
      %s162 = sphi 0, %s160
      %s163 = sphi 0, %s162
      %s177 = sphi 0, %s163
      %s185 = sphi 0, %s187
      %s188 = sphi 0, %s185
      %s189 = sphi 0, %s188
      %s205 = sphi 0, %s189
    $region4: #{tpu_custom_call.1} parent=1 // loop_header_branch
      %26 = sbr.rel (%p24) target = $region8
    $region5: #{tpu_custom_call.1} parent=1 // loop_body
      %s28 = ssub.s32 %s23, 1
      %s29 = ssub.s32 %s23, 2
      %s36 = sadd.s32 1, %s31
      %p37 = scmp.ge.s32.totalorder %s36, 1
      %s38 = scalar_select %p37, 0, %s36
      %s39 = sadd.s32 1, %s30
      %s40 = scalar_select %p37, %s39, %s30
      %p41 = scmp.ge.s32.totalorder %s40, 2
      %s42 = scalar_select %p41, 0, %s40
      %s43 = ssub.s32 %s30, %s42
      %p44 = scmp.eq.s32.totalorder %s43, 0
      %s46 = sadd.s32 %s45, 1
      %s47 = scalar_select %p44, %s45, %s46
      %p50 = pneg %p44
      %p51 = scmp.eq.s32.totalorder %s23, 1
      %p52 = por %p50, %p51
      %p53 = scmp.ne.s32.totalorder %s45, %s48
      %p54 = scmp.eq.s32.totalorder %s23, 0
      %p55 = por %p53, %p54
      %p56 = scmp.ne.s32.totalorder %s45, %s48
      %p57 = scmp.eq.s32.totalorder %s28, 1
      %p58 = por %p56, %p57
      %p59 = scmp.ne.s32.totalorder %s48, %s49
      %p60 = scmp.eq.s32.totalorder %s28, 0
      %p61 = por %p59, %p60
      %p62 = scmp.ne.s32.totalorder %s48, %s49
      %p63 = scmp.eq.s32.totalorder %s29, 1
      %p64 = por %p62, %p63
      %p66 = scmp.ne.s32.totalorder %s49, %s65
      %p67 = scmp.eq.s32.totalorder %s29, 0
      %p68 = por %p66, %p67
      %s69 = ssub.s32 %s30, %s42
      %s70 = ssub.s32 %s31, %s38
      %s71 = sor.u32 %s69, %s70
      %p72 = scmp.eq.s32.totalorder %s71, 0
      %s74 = sadd.s32 %s73, 1
      %s75 = scalar_select %p72, %s73, %s74
      %p78 = pneg %p72
      %p79 = scmp.eq.s32.totalorder %s23, 1
      %p80 = por %p78, %p79
      %p81 = scmp.ne.s32.totalorder %s73, %s76
      %p82 = scmp.eq.s32.totalorder %s23, 0
      %p83 = por %p81, %p82
      %p84 = scmp.ne.s32.totalorder %s73, %s76
      %p85 = scmp.eq.s32.totalorder %s28, 1
      %p86 = por %p84, %p85
      %p87 = scmp.ne.s32.totalorder %s76, %s77
      %p88 = scmp.eq.s32.totalorder %s28, 0
      %p89 = por %p87, %p88
      %p90 = scmp.ne.s32.totalorder %s76, %s77
      %p91 = scmp.eq.s32.totalorder %s29, 1
      %p92 = por %p90, %p91
      %p94 = scmp.ne.s32.totalorder %s77, %s93
      %p95 = scmp.eq.s32.totalorder %s29, 0
      %p96 = por %p94, %p95
      %s98 = sadd.s32 %s97, 1
      %p101 = scmp.eq.s32.totalorder %s23, 1
      %p102 = scmp.ne.s32.totalorder %s97, %s99
      %p103 = scmp.eq.s32.totalorder %s23, 0
      %p104 = por %p102, %p103
      %p105 = scmp.ne.s32.totalorder %s97, %s99
      %p106 = scmp.eq.s32.totalorder %s28, 1
      %p107 = por %p105, %p106
      %p108 = scmp.ne.s32.totalorder %s99, %s100
      %p109 = scmp.eq.s32.totalorder %s28, 0
      %p110 = por %p108, %p109
      %p111 = scmp.ne.s32.totalorder %s99, %s100
      %p112 = scmp.eq.s32.totalorder %s29, 1
      %p113 = por %p111, %p112
      %p115 = scmp.ne.s32.totalorder %s100, %s114
      %p116 = scmp.eq.s32.totalorder %s29, 0
      %p117 = por %p115, %p116
      %s119 = sadd.s32 %s118, 1
      %p122 = scmp.eq.s32.totalorder %s23, 1
      %p123 = scmp.ne.s32.totalorder %s118, %s120
      %p124 = scmp.eq.s32.totalorder %s23, 0
      %p125 = por %p123, %p124
      %p126 = scmp.ne.s32.totalorder %s118, %s120
      %p127 = scmp.eq.s32.totalorder %s28, 1
      %p128 = por %p126, %p127
      %p129 = scmp.ne.s32.totalorder %s120, %s121
      %p130 = scmp.eq.s32.totalorder %s28, 0
      %p131 = por %p129, %p130
      %p132 = scmp.ne.s32.totalorder %s120, %s121
      %p133 = scmp.eq.s32.totalorder %s29, 1
      %p134 = por %p132, %p133
      %p136 = scmp.ne.s32.totalorder %s121, %s135
      %p137 = scmp.eq.s32.totalorder %s29, 0
      %p138 = por %p136, %p137
      %s140 = sadd.s32 %s139, 1
      %p143 = scmp.eq.s32.totalorder %s23, 1
      %p144 = scmp.ne.s32.totalorder %s139, %s141
      %p145 = scmp.eq.s32.totalorder %s23, 0
      %p146 = por %p144, %p145
      %p147 = scmp.ne.s32.totalorder %s139, %s141
      %p148 = scmp.eq.s32.totalorder %s28, 1
      %p149 = por %p147, %p148
      %p150 = scmp.ne.s32.totalorder %s141, %s142
      %p151 = scmp.eq.s32.totalorder %s28, 0
      %p152 = por %p150, %p151
      %p153 = scmp.ne.s32.totalorder %s141, %s142
      %p154 = scmp.eq.s32.totalorder %s29, 1
      %p155 = por %p153, %p154
      %p157 = scmp.ne.s32.totalorder %s142, %s156
      %p158 = scmp.eq.s32.totalorder %s29, 0
      %p159 = por %p157, %p158
      %s161 = sadd.s32 %s160, 1
      %p164 = scmp.eq.s32.totalorder %s23, 1
      %p165 = scmp.ne.s32.totalorder %s160, %s162
      %p166 = scmp.eq.s32.totalorder %s23, 0
      %p167 = por %p165, %p166
      %p168 = scmp.ne.s32.totalorder %s160, %s162
      %p169 = scmp.eq.s32.totalorder %s28, 1
      %p170 = por %p168, %p169
      %p171 = scmp.ne.s32.totalorder %s162, %s163
      %p172 = scmp.eq.s32.totalorder %s28, 0
      %p173 = por %p171, %p172
      %p174 = scmp.ne.s32.totalorder %s162, %s163
      %p175 = scmp.eq.s32.totalorder %s29, 1
      %p176 = por %p174, %p175
      %p178 = scmp.ne.s32.totalorder %s163, %s177
      %p179 = scmp.eq.s32.totalorder %s29, 0
      %p180 = por %p178, %p179
      %s181 = ssub.s32 %s30, %s42
      %s182 = ssub.s32 %s31, %s38
      %s183 = sor.u32 %s181, %s182
      %p184 = scmp.eq.s32.totalorder %s183, 0
      %s186 = sadd.s32 %s185, 1
      %s187 = scalar_select %p184, %s185, %s186
      %p190 = pneg %p184
      %p191 = scmp.eq.s32.totalorder %s23, 1
      %p192 = por %p190, %p191
      %p193 = scmp.ne.s32.totalorder %s185, %s188
      %p194 = scmp.eq.s32.totalorder %s23, 0
      %p195 = por %p193, %p194
      %p196 = scmp.ne.s32.totalorder %s185, %s188
      %p197 = scmp.eq.s32.totalorder %s28, 1
      %p198 = por %p196, %p197
      %p199 = scmp.ne.s32.totalorder %s188, %s189
      %p200 = scmp.eq.s32.totalorder %s28, 0
      %p201 = por %p199, %p200
      %p202 = scmp.ne.s32.totalorder %s188, %s189
      %p203 = scmp.eq.s32.totalorder %s29, 1
      %p204 = por %p202, %p203
      %p206 = scmp.ne.s32.totalorder %s189, %s205
      %p207 = scmp.eq.s32.totalorder %s29, 0
      %p208 = por %p206, %p207
      %p209 = scmp.le.s32.totalorder 1, %s23
      %p210 = scmp.lt.s32.totalorder %s23, 3
      %p211 = pnand %p209, %p210
      %p212 = pneg %p211
      // Predicated region
      $region9: #{tpu_custom_call.1} parent=5 // pred_check
        _
      $region10: #{tpu_custom_call.1} parent=5 // pred_check_branch
        %214 = sbr.rel (%p211) target = $region12
      $region11: #{tpu_custom_call.1} parent=5 // pred_region
        %s215 = ssub.s32 %s23, 1
        // Predicated region
        $region13: #{tpu_custom_call.1} parent=11 // pred_check
          %p216 = pneg %p110
        $region14: #{tpu_custom_call.1} parent=11 // pred_check_branch
          %218 = sbr.rel (%p216) target = $region16
        $region15: #{tpu_custom_call.1} parent=11 // pred_region
          %s220 = ssub.s32 256, 256
          %221 = vsyncadd [#allocation8], %s220
          %s222 = sshll.u32 [#allocation9], 4
          %s223 = int_to_ptr.vmem [resolvable:$true] %s222
          %228 = dma.hbm_to_vmem [thread:$0]  %s2, 256, %s223, [#allocation8], 64, 64, 4
        $region16: #{tpu_custom_call.1} parent=11 // pred_fallthru
          _
        // Predicated region
        $region17: #{tpu_custom_call.1} parent=11 // pred_check
          %p229 = pneg %p131
        $region18: #{tpu_custom_call.1} parent=11 // pred_check_branch
          %231 = sbr.rel (%p229) target = $region20
        $region19: #{tpu_custom_call.1} parent=11 // pred_region
          %s233 = ssub.s32 16, 16
          %234 = vsyncadd [#allocation11], %s233
          %s236 = sshll.u32 [#allocation10], 4
          %s237 = int_to_ptr.vmem [resolvable:$true] %s236
          %239 = dma.hbm_to_vmem [thread:$0]  %s3, 16, %s237, [#allocation11]
        $region20: #{tpu_custom_call.1} parent=11 // pred_fallthru
          _
        // Predicated region
        $region21: #{tpu_custom_call.1} parent=11 // pred_check
          %p240 = pneg %p152
        $region22: #{tpu_custom_call.1} parent=11 // pred_check_branch
          %242 = sbr.rel (%p240) target = $region24
        $region23: #{tpu_custom_call.1} parent=11 // pred_region
          %s244 = ssub.s32 256, 256
          %245 = vsyncadd [#allocation11], %s244
          %s246 = sshll.u32 [#allocation12], 4
          %s247 = int_to_ptr.vmem [resolvable:$true] %s246
          %252 = dma.hbm_to_vmem [thread:$0]  %s4, 256, %s247, [#allocation11], 64, 64, 4
        $region24: #{tpu_custom_call.1} parent=11 // pred_fallthru
          _
        // Predicated region
        $region25: #{tpu_custom_call.1} parent=11 // pred_check
          %p253 = pneg %p173
        $region26: #{tpu_custom_call.1} parent=11 // pred_check_branch
          %255 = sbr.rel (%p253) target = $region28
        $region27: #{tpu_custom_call.1} parent=11 // pred_region
          %s257 = ssub.s32 16, 16
          %258 = vsyncadd [#allocation14], %s257
          %s260 = sshll.u32 [#allocation13], 4
          %s261 = int_to_ptr.vmem [resolvable:$true] %s260
          %263 = dma.hbm_to_vmem [thread:$0]  %s5, 16, %s261, [#allocation14]
        $region28: #{tpu_custom_call.1} parent=11 // pred_fallthru
          _
      $region12: #{tpu_custom_call.1} parent=5 // pred_fallthru
        _
      %p264 = scmp.lt.s32.totalorder %s23, 2
      // Predicated region
      $region29: #{tpu_custom_call.1} parent=5 // pred_check
        %p265 = pneg %p264
      $region30: #{tpu_custom_call.1} parent=5 // pred_check_branch
        %267 = sbr.rel (%p265) target = $region32
      $region31: #{tpu_custom_call.1} parent=5 // pred_region
        // Predicated region
        $region33: #{tpu_custom_call.1} parent=31 // pred_check
          %p268 = pneg %p55
        $region34: #{tpu_custom_call.1} parent=31 // pred_check_branch
          %270 = sbr.rel (%p268) target = $region36
        $region35: #{tpu_custom_call.1} parent=31 // pred_region
          %s271 = sand.u32 %s45, 1
          %s272 = scalar_lea.sflag [#allocation5], %s271
          %s273 = sand.u32 %s45, 1
          %s274 = smul.addr %s273, 4
          %s275 = scalar_lea.vmem [#allocation4], %s274
          %s277 = ssub.s32 64, 64
          %278 = vsyncadd %s272, %s277
          %s279 = smul.addr %s30, 64
          %s280 = scalar_lea.hbm %s0, %s279
          %s282 = sshll.u32 %s275, 4
          %s283 = int_to_ptr.vmem [resolvable:$true] %s282
          %285 = dma.hbm_to_vmem [thread:$0]  %s280, 64, %s283, %s272
        $region36: #{tpu_custom_call.1} parent=31 // pred_fallthru
          _
        // Predicated region
        $region37: #{tpu_custom_call.1} parent=31 // pred_check
          %p286 = pneg %p83
        $region38: #{tpu_custom_call.1} parent=31 // pred_check_branch
          %288 = sbr.rel (%p286) target = $region40
        $region39: #{tpu_custom_call.1} parent=31 // pred_region
          %s289 = sand.u32 %s23, 1
          %s290 = scalar_lea.sflag [#allocation8], %s289
          %s291 = sand.u32 %s73, 1
          %s292 = smul.addr %s291, 4
          %s293 = scalar_lea.vmem [#allocation7], %s292
          %s295 = ssub.s32 64, 64
          %296 = vsyncadd %s290, %s295
          %s297 = sadd.s32 %s31, %s30
          %s298 = smul.addr %s297, 64
          %s299 = scalar_lea.hbm %s1, %s298
          %s301 = sshll.u32 %s293, 4
          %s302 = int_to_ptr.vmem [resolvable:$true] %s301
          %304 = dma.hbm_to_vmem [thread:$0]  %s299, 64, %s302, %s290
        $region40: #{tpu_custom_call.1} parent=31 // pred_fallthru
          _
      $region32: #{tpu_custom_call.1} parent=5 // pred_fallthru
        _
      %p305 = scmp.le.s32.totalorder 1, %s23
      %p306 = scmp.lt.s32.totalorder %s23, 3
      %p307 = pnand %p305, %p306
      %p308 = pneg %p307
      // Predicated region
      $region41: #{tpu_custom_call.1} parent=5 // pred_check
        _
      $region42: #{tpu_custom_call.1} parent=5 // pred_check_branch
        %310 = sbr.rel (%p307) target = $region44
      $region43: #{tpu_custom_call.1} parent=5 // pred_region
        %s311 = ssub.s32 %s23, 1
        %s312 = sand.u32 %s48, 1
        %s313 = scalar_lea.sflag [#allocation5], %s312
        %s314 = sand.u32 %s48, 1
        %s315 = smul.addr %s314, 4
        %s316 = scalar_lea.vmem [#allocation4], %s315
        // Predicated region
        $region45: #{tpu_custom_call.1} parent=43 // pred_check
          %p317 = pneg %p61
        $region46: #{tpu_custom_call.1} parent=43 // pred_check_branch
          %319 = sbr.rel (%p317) target = $region48
        $region47: #{tpu_custom_call.1} parent=43 // pred_region
          %320 = dma.done %s313, 64
        $region48: #{tpu_custom_call.1} parent=43 // pred_fallthru
          _
        %s321 = sand.u32 %s28, 1
        %s322 = scalar_lea.sflag [#allocation8], %s321
        %s323 = sand.u32 %s76, 1
        %s324 = smul.addr %s323, 4
        %s325 = scalar_lea.vmem [#allocation7], %s324
        // Predicated region
        $region49: #{tpu_custom_call.1} parent=43 // pred_check
          %p326 = pneg %p89
        $region50: #{tpu_custom_call.1} parent=43 // pred_check_branch
          %328 = sbr.rel (%p326) target = $region52
        $region51: #{tpu_custom_call.1} parent=43 // pred_region
          %329 = dma.done %s322, 64
        $region52: #{tpu_custom_call.1} parent=43 // pred_fallthru
          _
        // Predicated region
        $region53: #{tpu_custom_call.1} parent=43 // pred_check
          %p330 = pneg %p110
        $region54: #{tpu_custom_call.1} parent=43 // pred_check_branch
          %332 = sbr.rel (%p330) target = $region56
        $region55: #{tpu_custom_call.1} parent=43 // pred_region
          %333 = dma.done [#allocation8], 256
        $region56: #{tpu_custom_call.1} parent=43 // pred_fallthru
          _
        // Predicated region
        $region57: #{tpu_custom_call.1} parent=43 // pred_check
          %p334 = pneg %p131
        $region58: #{tpu_custom_call.1} parent=43 // pred_check_branch
          %336 = sbr.rel (%p334) target = $region60
        $region59: #{tpu_custom_call.1} parent=43 // pred_region
          %337 = dma.done [#allocation11], 16
        $region60: #{tpu_custom_call.1} parent=43 // pred_fallthru
          _
        // Predicated region
        $region61: #{tpu_custom_call.1} parent=43 // pred_check
          %p338 = pneg %p152
        $region62: #{tpu_custom_call.1} parent=43 // pred_check_branch
          %340 = sbr.rel (%p338) target = $region64
        $region63: #{tpu_custom_call.1} parent=43 // pred_region
          %341 = dma.done [#allocation11], 256
        $region64: #{tpu_custom_call.1} parent=43 // pred_fallthru
          _
        // Predicated region
        $region65: #{tpu_custom_call.1} parent=43 // pred_check
          %p342 = pneg %p173
        $region66: #{tpu_custom_call.1} parent=43 // pred_check_branch
          %344 = sbr.rel (%p342) target = $region68
        $region67: #{tpu_custom_call.1} parent=43 // pred_region
          %345 = dma.done [#allocation14], 16
        $region68: #{tpu_custom_call.1} parent=43 // pred_fallthru
          _
        %s346 = sand.u32 %s48, 1
        %s347 = scalar_lea.sflag [#allocation5], %s346
        %s348 = sand.u32 %s48, 1
        %s349 = smul.addr %s348, 4
        %s350 = scalar_lea.vmem [#allocation4], %s349
        %p351 = pneg %p61
        %p352 = pneg %p58
        %s353 = sand.u32 %s28, 1
        %s354 = scalar_lea.sflag [#allocation8], %s353
        %s355 = sand.u32 %s76, 1
        %s356 = smul.addr %s355, 4
        %s357 = scalar_lea.vmem [#allocation7], %s356
        %p358 = pneg %p89
        %p359 = pneg %p86
        %p360 = pneg %p110
        %p361 = pneg %p107
        %p362 = pneg %p131
        %p363 = pneg %p128
        %p364 = pneg %p152
        %p365 = pneg %p149
        %p366 = pneg %p173
        %p367 = pneg %p170
        %p368 = pneg %p201
        %p369 = pneg %p198
        %s370 = sand.u32 %s188, 1
        %s371 = scalar_lea.sflag [#allocation6], %s370
        %s372 = sand.u32 %s188, 1
        %s373 = smul.addr %s372, 8
        %s374 = scalar_lea.vmem [#allocation15], %s373
        %p376 = scmp.eq.s32.totalorder %s33, 0
        // Predicated region
        $region69: #{tpu_custom_call.1} parent=43 // pred_check
          %p377 = pneg %p376
        $region70: #{tpu_custom_call.1} parent=43 // pred_check_branch
          %379 = sbr.rel (%p377) target = $region72
        $region71: #{tpu_custom_call.1} parent=43 // pred_region
          %v380 = vld [vmem:[%s316] sm:$0xf]
          %v381 = vld [vmem:[#allocation9] sm:$0xf]
          %v382 = vld [vmem:[#allocation9 + $0x4] sm:$0xf]
          %v383 = vld [vmem:[#allocation9 + $0x8] sm:$0xf]
          %v384 = vld [vmem:[#allocation9 + $0xc] sm:$0xf]
          %v385 = vld [vmem:[#allocation10] sm:$0x1]
          %v387 = vlaneseq
          %v388 = vshrl.u32 %v387, 7
          %v389 = vsub.s32 0, %v388
          %v390 = vrot.slane %v385, %v389
          %v395 = vunpack.c.l.b16 %v381
          %v396 = vunpack.c.l.b16 %v382
          %v397 = vunpack.c.l.b16 %v383
          %v398 = vunpack.c.l.b16 %v384
          %v399 = vpack.c.b16 %v396, %v395
          %v400 = vpack.c.b16 %v398, %v397
          %401 = vrot.lane.b32.xlu0 %v399, 96
          %v402 = vpop.permute.xlu0 %401
          %403 = vrot.lane.b32.xlu0 %v400, 96
          %v404 = vpop.permute.xlu0 %403
          %407 = vrot.lane.b32.xlu0 %v390, 96
          %v408 = vpop.permute.xlu0 %407
          %vm410 = vcmask 261120
          %v412 = vsel %vm410, %v380, 0
          %414 = vmatprep.subr.bf16.mxu0 0
          %415 = vmatpush1.bf16.msra.mxu0 %v402
          %416 = vmatprep.subr.bf16.mxu0 0
          %417 = vmatpush1.bf16.msra.mxu0 %v404
          %418 = vmatprep.subr.bf16.mxu0 0
          %419 = vmatpush1.bf16.msra.mxu0 0
          %420 = vmatprep.subr.bf16.mxu0 0
          %421 = vmatpush1.bf16.msra.mxu0 0
          %422 = vmatprep.subr.bf16.mxu0 0
          %423 = vmatpush1.bf16.msra.mxu0 0
          %424 = vmatprep.subr.bf16.mxu0 0
          %425 = vmatpush1.bf16.msra.mxu0 0
          %426 = vmatprep.subr.bf16.mxu0 0
          %427 = vmatpush1.bf16.msra.mxu0 0
          %428 = vmatprep.subr.bf16.mxu0 0
          %429 = vmatpush1.bf16.msra.mxu0 0
          %430 = vmatprep.subr.bf16.mxu0 0
          %431 = vmatpush1.bf16.msra.mxu0 0
          %432 = vmatprep.subr.bf16.mxu0 0
          %433 = vmatpush1.bf16.msra.mxu0 0
          %434 = vmatprep.subr.bf16.mxu0 0
          %435 = vmatpush1.bf16.msra.mxu0 0
          %436 = vmatprep.subr.bf16.mxu0 0
          %437 = vmatpush1.bf16.msra.mxu0 0
          %438 = vmatprep.subr.bf16.mxu0 0
          %439 = vmatpush1.bf16.msra.mxu0 0
          %440 = vmatprep.subr.bf16.mxu0 0
          %441 = vmatpush1.bf16.msra.mxu0 0
          %442 = vmatprep.subr.bf16.mxu0 0
          %443 = vmatpush1.bf16.msra.mxu0 0
          %444 = vmatprep.subr.bf16.mxu0 0
          %445 = vmatpush1.bf16.msra.mxu0 0
          %446 = vmatprep.mubr.bf16.mxu0 0
          %447 = vmatmul.mubr.bf16.gmra.mrb[0].mxu0 %v412
          %v448 = vpop.f32.mrb[0].mxu0
          %v449 = vadd.f32 %v408, %v448
          %v450 = vpop.f32.mrb[0].mxu0
          %v451 = vpop.f32.mrb[0].mxu0
          %v452 = vpop.f32.mrb[0].mxu0
          %453 = vdwg.mxu0
          %v454 = vpack.c.bf16 %v449, %v449
          %vm455 = vcmask 519168
          %456 = vst.msk [vmem:[#allocation2] sm:$0xf] %vm455, %v454
        $region72: #{tpu_custom_call.1} parent=43 // pred_fallthru
          _
        %s457 = smul.u32 %s33, 8
        %s458 = sshra.s32 %s457, 3
        %s459 = sand.u32 %s457, 7
        %s460 = smul.addr %s458, 4
        %s461 = scalar_lea.vmem %s316, %s460 [#allocation4]
        %v462 = vld [vmem:[%s461] sm:$0xf]
        %v463 = vld [vmem:[#allocation9] sm:$0xf]
        %v464 = vld [vmem:[#allocation9 + $0x4] sm:$0xf]
        %v465 = vld [vmem:[#allocation9 + $0x8] sm:$0xf]
        %v466 = vld [vmem:[#allocation9 + $0xc] sm:$0xf]
        %v467 = vld [vmem:[#allocation10] sm:$0x1]
        %v469 = vlaneseq
        %v470 = vshrl.u32 %v469, 7
        %v471 = vsub.s32 0, %v470
        %v472 = vrot.slane %v467, %v471
        %v478 = vunpack.c.l.b16 %v463
        %v479 = vunpack.c.l.b16 %v464
        %v480 = vunpack.c.l.b16 %v465
        %v481 = vunpack.c.l.b16 %v466
        %v482 = vpack.c.b16 %v479, %v478
        %v483 = vpack.c.b16 %v481, %v480
        %vm486 = vcmask 261120
        %v488 = vsel %vm486, %v462, 0
        %490 = vmatprep.subr.bf16.mxu0 0
        %491 = vmatpush1.bf16.msra.mxu0 %v482
        %492 = vmatprep.subr.bf16.mxu0 0
        %493 = vmatpush1.bf16.msra.mxu0 %v483
        %494 = vmatprep.subr.bf16.mxu0 0
        %495 = vmatpush1.bf16.msra.mxu0 0
        %496 = vmatprep.subr.bf16.mxu0 0
        %497 = vmatpush1.bf16.msra.mxu0 0
        %498 = vmatprep.subr.bf16.mxu0 0
        %499 = vmatpush1.bf16.msra.mxu0 0
        %500 = vmatprep.subr.bf16.mxu0 0
        %501 = vmatpush1.bf16.msra.mxu0 0
        %502 = vmatprep.subr.bf16.mxu0 0
        %503 = vmatpush1.bf16.msra.mxu0 0
        %504 = vmatprep.subr.bf16.mxu0 0
        %505 = vmatpush1.bf16.msra.mxu0 0
        %506 = vmatprep.subr.bf16.mxu0 0
        %507 = vmatpush1.bf16.msra.mxu0 0
        %508 = vmatprep.subr.bf16.mxu0 0
        %509 = vmatpush1.bf16.msra.mxu0 0
        %510 = vmatprep.subr.bf16.mxu0 0
        %511 = vmatpush1.bf16.msra.mxu0 0
        %512 = vmatprep.subr.bf16.mxu0 0
        %513 = vmatpush1.bf16.msra.mxu0 0
        %514 = vmatprep.subr.bf16.mxu0 0
        %515 = vmatpush1.bf16.msra.mxu0 0
        %516 = vmatprep.subr.bf16.mxu0 0
        %517 = vmatpush1.bf16.msra.mxu0 0
        %518 = vmatprep.subr.bf16.mxu0 0
        %519 = vmatpush1.bf16.msra.mxu0 0
        %520 = vmatprep.subr.bf16.mxu0 0
        %521 = vmatpush1.bf16.msra.mxu0 0
        %522 = vmatprep.mubr.bf16.mxu0 0
        %523 = vmatmul.mubr.bf16.gmra.mrb[0].mxu0 %v488
        %v524 = vpop.f32.mrb[0].mxu0
        %v525 = vadd.f32 %v472, %v524
        %v526 = vpop.f32.mrb[0].mxu0
        %v527 = vpop.f32.mrb[0].mxu0
        %v528 = vpop.f32.mrb[0].mxu0
        %529 = vdwg.mxu0
        %v530 = vmul.f32 %v525, 0.35355338
        %v531 = vpack.c.bf16 %v530, %v530
        %v532 = vld [vmem:[%s325] sm:$0xf]
        %v533 = vld [vmem:[#allocation2] sm:$0xf]
        %v534 = vunpack.c.l.bf16 %v532
        %vm535 = vcmask 64512
        %v537 = vsel %vm535, %v531, 0
        %v540 = vsel %vm535, %v533, 0
        %542 = vmatprep.subr.bf16.mxu0 0
        %543 = vmatpush1.bf16.xpose.msra.mxu0 %v540
        %544 = vmatprep.subr.bf16.mxu0 0
        %545 = vmatpush1.bf16.xpose.msra.mxu0 0
        %546 = vmatprep.subr.bf16.mxu0 0
        %547 = vmatpush1.bf16.xpose.msra.mxu0 0
        %548 = vmatprep.subr.bf16.mxu0 0
        %549 = vmatpush1.bf16.xpose.msra.mxu0 0
        %550 = vmatprep.subr.bf16.mxu0 0
        %551 = vmatpush1.bf16.xpose.msra.mxu0 0
        %552 = vmatprep.subr.bf16.mxu0 0
        %553 = vmatpush1.bf16.xpose.msra.mxu0 0
        %554 = vmatprep.subr.bf16.mxu0 0
        %555 = vmatpush1.bf16.xpose.msra.mxu0 0
        %556 = vmatprep.subr.bf16.mxu0 0
        %557 = vmatpush1.bf16.xpose.msra.mxu0 0
        %558 = vmatprep.subr.bf16.mxu0 0
        %559 = vmatpush1.bf16.xpose.msra.mxu0 0
        %560 = vmatprep.subr.bf16.mxu0 0
        %561 = vmatpush1.bf16.xpose.msra.mxu0 0
        %562 = vmatprep.subr.bf16.mxu0 0
        %563 = vmatpush1.bf16.xpose.msra.mxu0 0
        %564 = vmatprep.subr.bf16.mxu0 0
        %565 = vmatpush1.bf16.xpose.msra.mxu0 0
        %566 = vmatprep.subr.bf16.mxu0 0
        %567 = vmatpush1.bf16.xpose.msra.mxu0 0
        %568 = vmatprep.subr.bf16.mxu0 0
        %569 = vmatpush1.bf16.xpose.msra.mxu0 0
        %570 = vmatprep.subr.bf16.mxu0 0
        %571 = vmatpush1.bf16.xpose.msra.mxu0 0
        %572 = vmatprep.subr.bf16.mxu0 0
        %573 = vmatpush1.bf16.xpose.msra.mxu0 0
        %574 = vmatprep.mubr.bf16.mxu0 0
        %575 = vmatmul.mubr.bf16.gmra.mrb[0].mxu0 %v537
        %v576 = vpop.f32.mrb[0].mxu0
        %v577 = vadd.f32 %v534, %v576
        %v578 = vpop.f32.mrb[0].mxu0
        %v579 = vpop.f32.mrb[0].mxu0
        %v580 = vpop.f32.mrb[0].mxu0
        %581 = vdwg.mxu0
        %v582 = vsel %vm535, %v577, -inf
        %583 = vmax.xlane.f32.xlu0 %v582
        %v584 = vpop.xlane.xlu0 %583
        %v585 = vsub.f32 %v577, %v584
        %v586 = vmul.f32 %v585, 1.442695
        %v587 = vpow.pop %v586
        %v588 = vsel %vm535, %v587, 0.0
        %589 = vadd.xlane.f32.xlu0 %v588
        %v590 = vpop.xlane.xlu0 %589
        %v591 = vrcp.pop %v590
        %v592 = vmul.f32 %v587, %v591
        %v593 = vpack.c.bf16 %v592, %v592
        %v595 = vunpack.c.l.b16 %v533
        %v596 = vpack.c.b16 %v595, %v595
        %597 = vrot.lane.b32.xlu0 %v596, 96
        %v598 = vpop.permute.xlu0 %597
        %v600 = vsel %vm535, %v593, 0
        %vm602 = vcmask 1043456
        %v604 = vsel %vm602, %v598, 0
        %606 = vmatprep.subr.bf16.mxu0 0
        %607 = vmatpush1.bf16.msra.mxu0 %v604
        %608 = vmatprep.subr.bf16.mxu0 0
        %609 = vmatpush1.bf16.msra.mxu0 0
        %610 = vmatprep.subr.bf16.mxu0 0
        %611 = vmatpush1.bf16.msra.mxu0 0
        %612 = vmatprep.subr.bf16.mxu0 0
        %613 = vmatpush1.bf16.msra.mxu0 0
        %614 = vmatprep.subr.bf16.mxu0 0
        %615 = vmatpush1.bf16.msra.mxu0 0
        %616 = vmatprep.subr.bf16.mxu0 0
        %617 = vmatpush1.bf16.msra.mxu0 0
        %618 = vmatprep.subr.bf16.mxu0 0
        %619 = vmatpush1.bf16.msra.mxu0 0
        %620 = vmatprep.subr.bf16.mxu0 0
        %621 = vmatpush1.bf16.msra.mxu0 0
        %622 = vmatprep.subr.bf16.mxu0 0
        %623 = vmatpush1.bf16.msra.mxu0 0
        %624 = vmatprep.subr.bf16.mxu0 0
        %625 = vmatpush1.bf16.msra.mxu0 0
        %626 = vmatprep.subr.bf16.mxu0 0
        %627 = vmatpush1.bf16.msra.mxu0 0
        %628 = vmatprep.subr.bf16.mxu0 0
        %629 = vmatpush1.bf16.msra.mxu0 0
        %630 = vmatprep.subr.bf16.mxu0 0
        %631 = vmatpush1.bf16.msra.mxu0 0
        %632 = vmatprep.subr.bf16.mxu0 0
        %633 = vmatpush1.bf16.msra.mxu0 0
        %634 = vmatprep.subr.bf16.mxu0 0
        %635 = vmatpush1.bf16.msra.mxu0 0
        %636 = vmatprep.subr.bf16.mxu0 0
        %637 = vmatpush1.bf16.msra.mxu0 0
        %638 = vmatprep.mubr.bf16.mxu0 0
        %639 = vmatmul.mubr.bf16.gmra.mrb[0].mxu0 %v600
        %v640 = vpop.f32.mrb[0].mxu0
        %v641 = vadd.f32 0.0, %v640
        %v642 = vpop.f32.mrb[0].mxu0
        %v643 = vpop.f32.mrb[0].mxu0
        %v644 = vpop.f32.mrb[0].mxu0
        %645 = vdwg.mxu0
        %v646 = vpack.c.bf16 %v641, %v641
        %vm647 = vcmask 60416
        %648 = vst.msk [vmem:[#allocation3] sm:$0xf] %vm647, %v646
        %v649 = vld [vmem:[#allocation2] sm:$0xf]
        %651 = vrot.lane.b32.xlu0 %v531, 120
        %v652 = vpop.permute.xlu0 %651
        %v654 = vunpack.c.l.b16 %v649
        %v655 = vpack.c.b16 %v654, %v654
        %656 = vrot.lane.b32.xlu0 %v655, 120
        %v657 = vpop.permute.xlu0 %656
        %v659 = vsel %vm535, %v652, 0
        %v662 = vsel %vm535, %v657, 0
        %664 = vmatprep.subr.bf16.mxu0 0
        %665 = vmatpush1.bf16.xpose.msra.mxu0 %v662
        %666 = vmatprep.subr.bf16.mxu0 0
        %667 = vmatpush1.bf16.xpose.msra.mxu0 0
        %668 = vmatprep.subr.bf16.mxu0 0
        %669 = vmatpush1.bf16.xpose.msra.mxu0 0
        %670 = vmatprep.subr.bf16.mxu0 0
        %671 = vmatpush1.bf16.xpose.msra.mxu0 0
        %672 = vmatprep.subr.bf16.mxu0 0
        %673 = vmatpush1.bf16.xpose.msra.mxu0 0
        %674 = vmatprep.subr.bf16.mxu0 0
        %675 = vmatpush1.bf16.xpose.msra.mxu0 0
        %676 = vmatprep.subr.bf16.mxu0 0
        %677 = vmatpush1.bf16.xpose.msra.mxu0 0
        %678 = vmatprep.subr.bf16.mxu0 0
        %679 = vmatpush1.bf16.xpose.msra.mxu0 0
        %680 = vmatprep.subr.bf16.mxu0 0
        %681 = vmatpush1.bf16.xpose.msra.mxu0 0
        %682 = vmatprep.subr.bf16.mxu0 0
        %683 = vmatpush1.bf16.xpose.msra.mxu0 0
        %684 = vmatprep.subr.bf16.mxu0 0
        %685 = vmatpush1.bf16.xpose.msra.mxu0 0
        %686 = vmatprep.subr.bf16.mxu0 0
        %687 = vmatpush1.bf16.xpose.msra.mxu0 0
        %688 = vmatprep.subr.bf16.mxu0 0
        %689 = vmatpush1.bf16.xpose.msra.mxu0 0
        %690 = vmatprep.subr.bf16.mxu0 0
        %691 = vmatpush1.bf16.xpose.msra.mxu0 0
        %692 = vmatprep.subr.bf16.mxu0 0
        %693 = vmatpush1.bf16.xpose.msra.mxu0 0
        %694 = vmatprep.subr.bf16.mxu0 0
        %695 = vmatpush1.bf16.xpose.msra.mxu0 0
        %696 = vmatprep.mubr.bf16.mxu0 0
        %697 = vmatmul.mubr.bf16.gmra.mrb[0].mxu0 %v659
        %v698 = vpop.f32.mrb[0].mxu0
        %v699 = vadd.f32 %v534, %v698
        %v700 = vpop.f32.mrb[0].mxu0
        %v701 = vpop.f32.mrb[0].mxu0
        %v702 = vpop.f32.mrb[0].mxu0
        %703 = vdwg.mxu0
        %v704 = vsel %vm535, %v699, -inf
        %705 = vmax.xlane.f32.xlu0 %v704
        %v706 = vpop.xlane.xlu0 %705
        %v707 = vsub.f32 %v699, %v706
        %v708 = vmul.f32 %v707, 1.442695
        %v709 = vpow.pop %v708
        %v710 = vsel %vm535, %v709, 0.0
        %711 = vadd.xlane.f32.xlu0 %v710
        %v712 = vpop.xlane.xlu0 %711
        %v713 = vrcp.pop %v712
        %v714 = vmul.f32 %v709, %v713
        %v715 = vpack.c.bf16 %v714, %v714
        %716 = vrot.lane.b32.xlu0 %v655, 88
        %v717 = vpop.permute.xlu0 %716
        %v719 = vsel %vm535, %v715, 0
        %v722 = vsel %vm602, %v717, 0
        %724 = vmatprep.subr.bf16.mxu0 0
        %725 = vmatpush1.bf16.msra.mxu0 %v722
        %726 = vmatprep.subr.bf16.mxu0 0
        %727 = vmatpush1.bf16.msra.mxu0 0
        %728 = vmatprep.subr.bf16.mxu0 0
        %729 = vmatpush1.bf16.msra.mxu0 0
        %730 = vmatprep.subr.bf16.mxu0 0
        %731 = vmatpush1.bf16.msra.mxu0 0
        %732 = vmatprep.subr.bf16.mxu0 0
        %733 = vmatpush1.bf16.msra.mxu0 0
        %734 = vmatprep.subr.bf16.mxu0 0
        %735 = vmatpush1.bf16.msra.mxu0 0
        %736 = vmatprep.subr.bf16.mxu0 0
        %737 = vmatpush1.bf16.msra.mxu0 0
        %738 = vmatprep.subr.bf16.mxu0 0
        %739 = vmatpush1.bf16.msra.mxu0 0
        %740 = vmatprep.subr.bf16.mxu0 0
        %741 = vmatpush1.bf16.msra.mxu0 0
        %742 = vmatprep.subr.bf16.mxu0 0
        %743 = vmatpush1.bf16.msra.mxu0 0
        %744 = vmatprep.subr.bf16.mxu0 0
        %745 = vmatpush1.bf16.msra.mxu0 0
        %746 = vmatprep.subr.bf16.mxu0 0
        %747 = vmatpush1.bf16.msra.mxu0 0
        %748 = vmatprep.subr.bf16.mxu0 0
        %749 = vmatpush1.bf16.msra.mxu0 0
        %750 = vmatprep.subr.bf16.mxu0 0
        %751 = vmatpush1.bf16.msra.mxu0 0
        %752 = vmatprep.subr.bf16.mxu0 0
        %753 = vmatpush1.bf16.msra.mxu0 0
        %754 = vmatprep.subr.bf16.mxu0 0
        %755 = vmatpush1.bf16.msra.mxu0 0
        %756 = vmatprep.mubr.bf16.mxu0 0
        %757 = vmatmul.mubr.bf16.gmra.mrb[0].mxu0 %v719
        %v758 = vpop.f32.mrb[0].mxu0
        %v759 = vadd.f32 0.0, %v758
        %v760 = vpop.f32.mrb[0].mxu0
        %v761 = vpop.f32.mrb[0].mxu0
        %v762 = vpop.f32.mrb[0].mxu0
        %763 = vdwg.mxu0
        %v764 = vpack.c.bf16 %v759, %v759
        %v766 = vunpack.c.l.b16 %v764
        %v767 = vpack.c.b16 %v766, %v766
        %768 = vrot.lane.b32.xlu0 %v767, 8
        %v769 = vpop.permute.xlu0 %768
        %vm771 = vcmask 126016
        %772 = vst.msk [vmem:[#allocation3] sm:$0xf] %vm771, %v769
        %v773 = vld [vmem:[#allocation2] sm:$0xf]
        %774 = vrot.lane.b32.xlu0 %v531, 112
        %v775 = vpop.permute.xlu0 %774
        %v777 = vunpack.c.l.b16 %v773
        %v778 = vpack.c.b16 %v777, %v777
        %779 = vrot.lane.b32.xlu0 %v778, 112
        %v780 = vpop.permute.xlu0 %779
        %v782 = vsel %vm535, %v775, 0
        %v785 = vsel %vm535, %v780, 0
        %787 = vmatprep.subr.bf16.mxu0 0
        %788 = vmatpush1.bf16.xpose.msra.mxu0 %v785
        %789 = vmatprep.subr.bf16.mxu0 0
        %790 = vmatpush1.bf16.xpose.msra.mxu0 0
        %791 = vmatprep.subr.bf16.mxu0 0
        %792 = vmatpush1.bf16.xpose.msra.mxu0 0
        %793 = vmatprep.subr.bf16.mxu0 0
        %794 = vmatpush1.bf16.xpose.msra.mxu0 0
        %795 = vmatprep.subr.bf16.mxu0 0
        %796 = vmatpush1.bf16.xpose.msra.mxu0 0
        %797 = vmatprep.subr.bf16.mxu0 0
        %798 = vmatpush1.bf16.xpose.msra.mxu0 0
        %799 = vmatprep.subr.bf16.mxu0 0
        %800 = vmatpush1.bf16.xpose.msra.mxu0 0
        %801 = vmatprep.subr.bf16.mxu0 0
        %802 = vmatpush1.bf16.xpose.msra.mxu0 0
        %803 = vmatprep.subr.bf16.mxu0 0
        %804 = vmatpush1.bf16.xpose.msra.mxu0 0
        %805 = vmatprep.subr.bf16.mxu0 0
        %806 = vmatpush1.bf16.xpose.msra.mxu0 0
        %807 = vmatprep.subr.bf16.mxu0 0
        %808 = vmatpush1.bf16.xpose.msra.mxu0 0
        %809 = vmatprep.subr.bf16.mxu0 0
        %810 = vmatpush1.bf16.xpose.msra.mxu0 0
        %811 = vmatprep.subr.bf16.mxu0 0
        %812 = vmatpush1.bf16.xpose.msra.mxu0 0
        %813 = vmatprep.subr.bf16.mxu0 0
        %814 = vmatpush1.bf16.xpose.msra.mxu0 0
        %815 = vmatprep.subr.bf16.mxu0 0
        %816 = vmatpush1.bf16.xpose.msra.mxu0 0
        %817 = vmatprep.subr.bf16.mxu0 0
        %818 = vmatpush1.bf16.xpose.msra.mxu0 0
        %819 = vmatprep.mubr.bf16.mxu0 0
        %820 = vmatmul.mubr.bf16.gmra.mrb[0].mxu0 %v782
        %v821 = vpop.f32.mrb[0].mxu0
        %v822 = vadd.f32 %v534, %v821
        %v823 = vpop.f32.mrb[0].mxu0
        %v824 = vpop.f32.mrb[0].mxu0
        %v825 = vpop.f32.mrb[0].mxu0
        %826 = vdwg.mxu0
        %v827 = vsel %vm535, %v822, -inf
        %828 = vmax.xlane.f32.xlu0 %v827
        %v829 = vpop.xlane.xlu0 %828
        %v830 = vsub.f32 %v822, %v829
        %v831 = vmul.f32 %v830, 1.442695
        %v832 = vpow.pop %v831
        %v833 = vsel %vm535, %v832, 0.0
        %834 = vadd.xlane.f32.xlu0 %v833
        %v835 = vpop.xlane.xlu0 %834
        %v836 = vrcp.pop %v835
        %v837 = vmul.f32 %v832, %v836
        %v838 = vpack.c.bf16 %v837, %v837
        %839 = vrot.lane.b32.xlu0 %v778, 80
        %v840 = vpop.permute.xlu0 %839
        %v842 = vsel %vm535, %v838, 0
        %v845 = vsel %vm602, %v840, 0
        %847 = vmatprep.subr.bf16.mxu0 0
        %848 = vmatpush1.bf16.msra.mxu0 %v845
        %849 = vmatprep.subr.bf16.mxu0 0
        %850 = vmatpush1.bf16.msra.mxu0 0
        %851 = vmatprep.subr.bf16.mxu0 0
        %852 = vmatpush1.bf16.msra.mxu0 0
        %853 = vmatprep.subr.bf16.mxu0 0
        %854 = vmatpush1.bf16.msra.mxu0 0
        %855 = vmatprep.subr.bf16.mxu0 0
        %856 = vmatpush1.bf16.msra.mxu0 0
        %857 = vmatprep.subr.bf16.mxu0 0
        %858 = vmatpush1.bf16.msra.mxu0 0
        %859 = vmatprep.subr.bf16.mxu0 0
        %860 = vmatpush1.bf16.msra.mxu0 0
        %861 = vmatprep.subr.bf16.mxu0 0
        %862 = vmatpush1.bf16.msra.mxu0 0
        %863 = vmatprep.subr.bf16.mxu0 0
        %864 = vmatpush1.bf16.msra.mxu0 0
        %865 = vmatprep.subr.bf16.mxu0 0
        %866 = vmatpush1.bf16.msra.mxu0 0
        %867 = vmatprep.subr.bf16.mxu0 0
        %868 = vmatpush1.bf16.msra.mxu0 0
        %869 = vmatprep.subr.bf16.mxu0 0
        %870 = vmatpush1.bf16.msra.mxu0 0
        %871 = vmatprep.subr.bf16.mxu0 0
        %872 = vmatpush1.bf16.msra.mxu0 0
        %873 = vmatprep.subr.bf16.mxu0 0
        %874 = vmatpush1.bf16.msra.mxu0 0
        %875 = vmatprep.subr.bf16.mxu0 0
        %876 = vmatpush1.bf16.msra.mxu0 0
        %877 = vmatprep.subr.bf16.mxu0 0
        %878 = vmatpush1.bf16.msra.mxu0 0
        %879 = vmatprep.mubr.bf16.mxu0 0
        %880 = vmatmul.mubr.bf16.gmra.mrb[0].mxu0 %v842
        %v881 = vpop.f32.mrb[0].mxu0
        %v882 = vadd.f32 0.0, %v881
        %v883 = vpop.f32.mrb[0].mxu0
        %v884 = vpop.f32.mrb[0].mxu0
        %v885 = vpop.f32.mrb[0].mxu0
        %886 = vdwg.mxu0
        %v887 = vpack.c.bf16 %v882, %v882
        %v889 = vunpack.c.l.b16 %v887
        %v890 = vpack.c.b16 %v889, %v889
        %891 = vrot.lane.b32.xlu0 %v890, 16
        %v892 = vpop.permute.xlu0 %891
        %vm894 = vcmask 191616
        %895 = vst.msk [vmem:[#allocation3] sm:$0xf] %vm894, %v892
        %v896 = vld [vmem:[#allocation2] sm:$0xf]
        %897 = vrot.lane.b32.xlu0 %v531, 104
        %v898 = vpop.permute.xlu0 %897
        %v900 = vunpack.c.l.b16 %v896
        %v901 = vpack.c.b16 %v900, %v900
        %902 = vrot.lane.b32.xlu0 %v901, 104
        %v903 = vpop.permute.xlu0 %902
        %v905 = vsel %vm535, %v898, 0
        %v908 = vsel %vm535, %v903, 0
        %910 = vmatprep.subr.bf16.mxu0 0
        %911 = vmatpush1.bf16.xpose.msra.mxu0 %v908
        %912 = vmatprep.subr.bf16.mxu0 0
        %913 = vmatpush1.bf16.xpose.msra.mxu0 0
        %914 = vmatprep.subr.bf16.mxu0 0
        %915 = vmatpush1.bf16.xpose.msra.mxu0 0
        %916 = vmatprep.subr.bf16.mxu0 0
        %917 = vmatpush1.bf16.xpose.msra.mxu0 0
        %918 = vmatprep.subr.bf16.mxu0 0
        %919 = vmatpush1.bf16.xpose.msra.mxu0 0
        %920 = vmatprep.subr.bf16.mxu0 0
        %921 = vmatpush1.bf16.xpose.msra.mxu0 0
        %922 = vmatprep.subr.bf16.mxu0 0
        %923 = vmatpush1.bf16.xpose.msra.mxu0 0
        %924 = vmatprep.subr.bf16.mxu0 0
        %925 = vmatpush1.bf16.xpose.msra.mxu0 0
        %926 = vmatprep.subr.bf16.mxu0 0
        %927 = vmatpush1.bf16.xpose.msra.mxu0 0
        %928 = vmatprep.subr.bf16.mxu0 0
        %929 = vmatpush1.bf16.xpose.msra.mxu0 0
        %930 = vmatprep.subr.bf16.mxu0 0
        %931 = vmatpush1.bf16.xpose.msra.mxu0 0
        %932 = vmatprep.subr.bf16.mxu0 0
        %933 = vmatpush1.bf16.xpose.msra.mxu0 0
        %934 = vmatprep.subr.bf16.mxu0 0
        %935 = vmatpush1.bf16.xpose.msra.mxu0 0
        %936 = vmatprep.subr.bf16.mxu0 0
        %937 = vmatpush1.bf16.xpose.msra.mxu0 0
        %938 = vmatprep.subr.bf16.mxu0 0
        %939 = vmatpush1.bf16.xpose.msra.mxu0 0
        %940 = vmatprep.subr.bf16.mxu0 0
        %941 = vmatpush1.bf16.xpose.msra.mxu0 0
        %942 = vmatprep.mubr.bf16.mxu0 0
        %943 = vmatmul.mubr.bf16.gmra.mrb[0].mxu0 %v905
        %v944 = vpop.f32.mrb[0].mxu0
        %v945 = vadd.f32 %v534, %v944
        %v946 = vpop.f32.mrb[0].mxu0
        %v947 = vpop.f32.mrb[0].mxu0
        %v948 = vpop.f32.mrb[0].mxu0
        %949 = vdwg.mxu0
        %v950 = vsel %vm535, %v945, -inf
        %951 = vmax.xlane.f32.xlu0 %v950
        %v952 = vpop.xlane.xlu0 %951
        %v953 = vsub.f32 %v945, %v952
        %v954 = vmul.f32 %v953, 1.442695
        %v955 = vpow.pop %v954
        %v956 = vsel %vm535, %v955, 0.0
        %957 = vadd.xlane.f32.xlu0 %v956
        %v958 = vpop.xlane.xlu0 %957
        %v959 = vrcp.pop %v958
        %v960 = vmul.f32 %v955, %v959
        %v961 = vpack.c.bf16 %v960, %v960
        %962 = vrot.lane.b32.xlu0 %v901, 72
        %v963 = vpop.permute.xlu0 %962
        %v965 = vsel %vm535, %v961, 0
        %v968 = vsel %vm602, %v963, 0
        %970 = vmatprep.subr.bf16.mxu0 0
        %971 = vmatpush1.bf16.msra.mxu0 %v968
        %972 = vmatprep.subr.bf16.mxu0 0
        %973 = vmatpush1.bf16.msra.mxu0 0
        %974 = vmatprep.subr.bf16.mxu0 0
        %975 = vmatpush1.bf16.msra.mxu0 0
        %976 = vmatprep.subr.bf16.mxu0 0
        %977 = vmatpush1.bf16.msra.mxu0 0
        %978 = vmatprep.subr.bf16.mxu0 0
        %979 = vmatpush1.bf16.msra.mxu0 0
        %980 = vmatprep.subr.bf16.mxu0 0
        %981 = vmatpush1.bf16.msra.mxu0 0
        %982 = vmatprep.subr.bf16.mxu0 0
        %983 = vmatpush1.bf16.msra.mxu0 0
        %984 = vmatprep.subr.bf16.mxu0 0
        %985 = vmatpush1.bf16.msra.mxu0 0
        %986 = vmatprep.subr.bf16.mxu0 0
        %987 = vmatpush1.bf16.msra.mxu0 0
        %988 = vmatprep.subr.bf16.mxu0 0
        %989 = vmatpush1.bf16.msra.mxu0 0
        %990 = vmatprep.subr.bf16.mxu0 0
        %991 = vmatpush1.bf16.msra.mxu0 0
        %992 = vmatprep.subr.bf16.mxu0 0
        %993 = vmatpush1.bf16.msra.mxu0 0
        %994 = vmatprep.subr.bf16.mxu0 0
        %995 = vmatpush1.bf16.msra.mxu0 0
        %996 = vmatprep.subr.bf16.mxu0 0
        %997 = vmatpush1.bf16.msra.mxu0 0
        %998 = vmatprep.subr.bf16.mxu0 0
        %999 = vmatpush1.bf16.msra.mxu0 0
        %1000 = vmatprep.subr.bf16.mxu0 0
        %1001 = vmatpush1.bf16.msra.mxu0 0
        %1002 = vmatprep.mubr.bf16.mxu0 0
        %1003 = vmatmul.mubr.bf16.gmra.mrb[0].mxu0 %v965
        %v1004 = vpop.f32.mrb[0].mxu0
        %v1005 = vadd.f32 0.0, %v1004
        %v1006 = vpop.f32.mrb[0].mxu0
        %v1007 = vpop.f32.mrb[0].mxu0
        %v1008 = vpop.f32.mrb[0].mxu0
        %1009 = vdwg.mxu0
        %v1010 = vpack.c.bf16 %v1005, %v1005
        %v1012 = vunpack.c.l.b16 %v1010
        %v1013 = vpack.c.b16 %v1012, %v1012
        %1014 = vrot.lane.b32.xlu0 %v1013, 24
        %v1015 = vpop.permute.xlu0 %1014
        %vm1017 = vcmask 257216
        %1018 = vst.msk [vmem:[#allocation3] sm:$0xf] %vm1017, %v1015
        %v1019 = vld [vmem:[#allocation3] sm:$0xf]
        %v1020 = vld [vmem:[#allocation12] sm:$0xf]
        %v1021 = vld [vmem:[#allocation12 + $0x4] sm:$0xf]
        %v1022 = vld [vmem:[#allocation12 + $0x8] sm:$0xf]
        %v1023 = vld [vmem:[#allocation12 + $0xc] sm:$0xf]
        %v1024 = vld [vmem:[#allocation13] sm:$0x1]
        %v1026 = vlaneseq
        %v1027 = vshrl.u32 %v1026, 7
        %v1028 = vsub.s32 0, %v1027
        %v1029 = vrot.slane %v1024, %v1028
        %v1035 = vunpack.c.l.b16 %v1020
        %v1036 = vunpack.c.l.b16 %v1021
        %v1037 = vunpack.c.l.b16 %v1022
        %v1038 = vunpack.c.l.b16 %v1023
        %v1039 = vpack.c.b16 %v1036, %v1035
        %v1040 = vpack.c.b16 %v1038, %v1037
        %v1044 = vsel %vm486, %v1019, 0
        %1046 = vmatprep.subr.bf16.mxu0 0
        %1047 = vmatpush1.bf16.msra.mxu0 %v1039
        %1048 = vmatprep.subr.bf16.mxu0 0
        %1049 = vmatpush1.bf16.msra.mxu0 %v1040
        %1050 = vmatprep.subr.bf16.mxu0 0
        %1051 = vmatpush1.bf16.msra.mxu0 0
        %1052 = vmatprep.subr.bf16.mxu0 0
        %1053 = vmatpush1.bf16.msra.mxu0 0
        %1054 = vmatprep.subr.bf16.mxu0 0
        %1055 = vmatpush1.bf16.msra.mxu0 0
        %1056 = vmatprep.subr.bf16.mxu0 0
        %1057 = vmatpush1.bf16.msra.mxu0 0
        %1058 = vmatprep.subr.bf16.mxu0 0
        %1059 = vmatpush1.bf16.msra.mxu0 0
        %1060 = vmatprep.subr.bf16.mxu0 0
        %1061 = vmatpush1.bf16.msra.mxu0 0
        %1062 = vmatprep.subr.bf16.mxu0 0
        %1063 = vmatpush1.bf16.msra.mxu0 0
        %1064 = vmatprep.subr.bf16.mxu0 0
        %1065 = vmatpush1.bf16.msra.mxu0 0
        %1066 = vmatprep.subr.bf16.mxu0 0
        %1067 = vmatpush1.bf16.msra.mxu0 0
        %1068 = vmatprep.subr.bf16.mxu0 0
        %1069 = vmatpush1.bf16.msra.mxu0 0
        %1070 = vmatprep.subr.bf16.mxu0 0
        %1071 = vmatpush1.bf16.msra.mxu0 0
        %1072 = vmatprep.subr.bf16.mxu0 0
        %1073 = vmatpush1.bf16.msra.mxu0 0
        %1074 = vmatprep.subr.bf16.mxu0 0
        %1075 = vmatpush1.bf16.msra.mxu0 0
        %1076 = vmatprep.subr.bf16.mxu0 0
        %1077 = vmatpush1.bf16.msra.mxu0 0
        %1078 = vmatprep.mubr.bf16.mxu0 0
        %1079 = vmatmul.mubr.bf16.gmra.mrb[0].mxu0 %v1044
        %v1080 = vpop.f32.mrb[0].mxu0
        %v1081 = vadd.f32 %v1029, %v1080
        %v1082 = vpop.f32.mrb[0].mxu0
        %v1083 = vpop.f32.mrb[0].mxu0
        %v1084 = vpop.f32.mrb[0].mxu0
        %1085 = vdwg.mxu0
        %1086 = vst.msk [vmem:[%s374] sm:$0xff] %vm486, %v1081
        %s1087 = sand.u32 %s188, 1
        %s1088 = scalar_lea.sflag [#allocation6], %s1087
        %s1089 = sand.u32 %s188, 1
        %s1090 = smul.addr %s1089, 8
        %s1091 = scalar_lea.vmem [#allocation15], %s1090
        // Predicated region
        $region73: #{tpu_custom_call.1} parent=43 // pred_check
          %p1092 = pneg %p198
        $region74: #{tpu_custom_call.1} parent=43 // pred_check_branch
          %1094 = sbr.rel (%p1092) target = $region76
        $region75: #{tpu_custom_call.1} parent=43 // pred_region
          %s1096 = ssub.s32 128, 128
          %1097 = vsyncadd %s1088, %s1096
          %s1098 = sadd.s32 %s33, %s32
          %s1099 = smul.addr %s1098, 128
          %s1100 = scalar_lea.hbm %s6, %s1099
          %s1102 = sshll.u32 %s1091, 4
          %s1103 = int_to_ptr.vmem [resolvable:$true] %s1102
          %1105 = dma.vmem_to_hbm [thread:$0]  %s1103, 128, %s1100, %s1088
        $region76: #{tpu_custom_call.1} parent=43 // pred_fallthru
          _
      $region44: #{tpu_custom_call.1} parent=5 // pred_fallthru
        _
      %p1106 = scmp.le.s32.totalorder 2, %s23
      // Predicated region
      $region77: #{tpu_custom_call.1} parent=5 // pred_check
        %p1107 = pneg %p1106
      $region78: #{tpu_custom_call.1} parent=5 // pred_check_branch
        %1109 = sbr.rel (%p1107) target = $region80
      $region79: #{tpu_custom_call.1} parent=5 // pred_region
        %s1110 = ssub.s32 %s23, 2
        // Predicated region
        $region81: #{tpu_custom_call.1} parent=79 // pred_check
          %p1111 = pneg %p204
        $region82: #{tpu_custom_call.1} parent=79 // pred_check_branch
          %1113 = sbr.rel (%p1111) target = $region84
        $region83: #{tpu_custom_call.1} parent=79 // pred_region
          %s1114 = sand.u32 %s189, 1
          %s1115 = scalar_lea.sflag [#allocation6], %s1114
          %s1116 = sand.u32 %s189, 1
          %s1117 = smul.addr %s1116, 8
          %s1118 = scalar_lea.vmem [#allocation15], %s1117
          %1119 = dma.done %s1115, 128
        $region84: #{tpu_custom_call.1} parent=79 // pred_fallthru
          _
      $region80: #{tpu_custom_call.1} parent=5 // pred_fallthru
        _
    $region6: #{tpu_custom_call.1} parent=1 // loop_footer
      %s27 = sadd.s32 1, %s23
    $region7: #{tpu_custom_call.1} parent=1 // loop_footer_branch
      %22 = sbr.rel target = $region3
    $region8: #{tpu_custom_call.1} parent=1 // loop_exit
      _
    %1120 = vsyncpa [#allocation5], 1
    %s1121 = scalar_lea.sflag [#allocation5], 1
    %1122 = vsyncpa %s1121, 1
    %1123 = vsyncpa [#allocation8], 1
    %s1124 = scalar_lea.sflag [#allocation8], 1
    %1125 = vsyncpa %s1124, 1
    %1126 = vsyncpa [#allocation11], 1
    %1127 = vsyncpa [#allocation14], 1
    %1128 = vsyncpa [#allocation6], 1
    %s1129 = scalar_lea.sflag [#allocation6], 1
    %1130 = vsyncpa %s1129, 1

</llo_original>
